<compile_context>
chip_gen: v5e
topology: v5e:2x2
jax: 0.10.0
libtpu: 0.0.40
codegen_flags: <defaults>
</compile_context>

<pallas_src>
import functools

import jax
import jax.numpy as jnp
from jax import lax
from jax.experimental import pallas as pl
from jax.experimental.pallas import tpu as pltpu

_F32 = jnp.float32
_BF16 = jnp.bfloat16
_VMEM_LIMIT = 48 * 1024 * 1024   # safe on v5e/v6e (128 MiB) and v7x (64 MiB)


# --------------------------------------------------------------------------
# host-side helpers
# --------------------------------------------------------------------------
def _centered_dft_matrix(n, inverse):
    """M such that fftshift((i)fft(ifftshift(x, 0), 0, norm='ortho'), 0) == M @ x."""
    eye = jnp.eye(n, dtype=jnp.complex64)
    shifted = jnp.fft.ifftshift(eye, axes=0)
    t = (jnp.fft.ifft if inverse else jnp.fft.fft)(shifted, axis=0, norm="ortho")
    return jnp.fft.fftshift(t, axes=0)


def _edge_masks(H, W):
    """(8, H*W) f32 validity masks for the non-centre 3x3 taps (exact int math)."""
    hh = jnp.arange(H, dtype=jnp.int32)[:, None]
    ww = jnp.arange(W, dtype=jnp.int32)[None, :]
    rows = []
    for dy in (-1, 0, 1):
        for dx in (-1, 0, 1):
            if dy == 0 and dx == 0:
                continue
            ok = ((hh + dy >= 0) & (hh + dy < H) & (ww + dx >= 0) & (ww + dx < W))
            rows.append(ok.reshape(H * W))
    return jnp.stack(rows).astype(_F32)


@functools.lru_cache(maxsize=None)
def _roll_like_jnp():
    """Probe pltpu.roll's rotation direction once (compiled path, same backend
    as the real kernels; must be called outside of any jit trace)."""
    def probe(x_ref, o_ref):
        o_ref[...] = pltpu.roll(x_ref[...], 1, axis=1)

    x = jnp.broadcast_to(jnp.arange(128, dtype=_F32), (8, 128))
    out = pl.pallas_call(probe, out_shape=jax.ShapeDtypeStruct((8, 128), _F32))(x)
    return int(out[0, 0]) == 127


# --------------------------------------------------------------------------
# kernel 1: centered ifft2 + coil combine (grid = (B, N), N = reduction axis)
# --------------------------------------------------------------------------
def _ifft2_combine_kernel(mwr_ref, mwi_ref, mhr_ref, mhi_ref,
                          kr_ref, ki_ref, sr_ref, si_ref, o_ref,
                          *, C, H, W):
    n = pl.program_id(1)
    kr = kr_ref[...].reshape(C * H, W)            # bf16, free merge (H mult of 8/16)
    ki = ki_ref[...].reshape(C * H, W)
    mwr = mwr_ref[...]
    mwi = mwi_ref[...]
    # centered ifft along W: right-multiply by MW^T (4-mult complex, f32 acc)
    zr = (jnp.dot(kr, mwr, preferred_element_type=_F32)
          - jnp.dot(ki, mwi, preferred_element_type=_F32))
    zi = (jnp.dot(kr, mwi, preferred_element_type=_F32)
          + jnp.dot(ki, mwr, preferred_element_type=_F32))

    mhr = mhr_ref[...]
    mhi = mhi_ref[...]
    sr = sr_ref[...]                              # (C, H, W) bf16
    si = si_ref[...]

    prs, pis = [], []
    for c in range(C):                            # centered ifft along H per contrast
        zrc = zr[c * H:(c + 1) * H, :].astype(_BF16)
        zic = zi[c * H:(c + 1) * H, :].astype(_BF16)
        yr = (jnp.dot(mhr, zrc, preferred_element_type=_F32)
              - jnp.dot(mhi, zic, preferred_element_type=_F32))
        yi = (jnp.dot(mhr, zic, preferred_element_type=_F32)
              + jnp.dot(mhi, zrc, preferred_element_type=_F32))
        src = sr[c].astype(_F32)
        sic = si[c].astype(_F32)
        prs.append(yr * src + yi * sic)           # img * conj(sens)
        pis.append(yi * src - yr * sic)

    @pl.when(n == 0)
    def _():
        for c in range(C):
            o_ref[c] = prs[c]
            o_ref[C + c] = pis[c]

    @pl.when(n != 0)
    def _():
        for c in range(C):
            o_ref[c] = o_ref[c] + prs[c]
            o_ref[C + c] = o_ref[C + c] + pis[c]


def _ifft2_combine_call(mwr, mwi, mhr, mhi, kr, ki, sr, si):
    B, C, N, H, W = kr.shape
    mw_spec = pl.BlockSpec((W, W), lambda b, n: (0, 0))
    mh_spec = pl.BlockSpec((H, H), lambda b, n: (0, 0))
    coil_spec = pl.BlockSpec((None, C, None, H, W), lambda b, n: (b, 0, n, 0, 0))
    out_spec = pl.BlockSpec((None, 2 * C, H, W), lambda b, n: (b, 0, 0, 0))
    kern = functools.partial(_ifft2_combine_kernel, C=C, H=H, W=W)
    flops = int(2 * B * N * 4 * (C * H * W * W + C * H * H * W) + 8 * B * N * C * H * W)
    bytes_acc = int(4 * B * N * C * H * W * 2 + 4 * B * 2 * C * H * W
                    + 2 * 2 * (H * H + W * W))
    return pl.pallas_call(
        kern,
        out_shape=jax.ShapeDtypeStruct((B, 2 * C, H, W), _F32),
        grid_spec=pltpu.PrefetchScalarGridSpec(
            num_scalar_prefetch=0,
            grid=(B, N),
            in_specs=[mw_spec, mw_spec, mh_spec, mh_spec] + [coil_spec] * 4,
            out_specs=out_spec),
        compiler_params=pltpu.CompilerParams(
            dimension_semantics=("parallel", "arbitrary"),
            vmem_limit_bytes=_VMEM_LIMIT),
        cost_estimate=pl.CostEstimate(flops=flops, transcendentals=0,
                                      bytes_accessed=bytes_acc),
    )(mwr, mwi, mhr, mhi, kr, ki, sr, si)


# --------------------------------------------------------------------------
# kernel 2: norm -> conv3x3 -> ReLU -> conv3x3 -> unnorm (lane-dense (2C, HW))
# --------------------------------------------------------------------------
def _cnn_kernel(x_ref, m_ref, w1_ref, b1_ref, w2_ref, b2_ref, o_ref, s_ref,
                *, shifts):
    C2, HW = x_ref.shape
    x = x_ref[...]                                # (C2, HW) f32
    masks = m_ref[...]                            # (8, HW)  f32

    # ---- norm (per channel over all pixels, unbiased std like torch.std) ----
    mean = jnp.sum(x, axis=1, keepdims=True) * (1.0 / HW)
    d = x - mean
    var = jnp.sum(d * d, axis=1, keepdims=True) * (1.0 / (HW - 1))
    inv_std = lax.rsqrt(var)                      # EUP, avoids sqrt + divide
    std = var * inv_std                           # == sqrt(var)
    xn = d * inv_std

    # ---- im2col into bf16 scratch: taps via lane rolls + resident edge masks ----
    def im2col(u):
        j = 0
        for t, shift in enumerate(shifts):
            if shift is None:                     # centre tap
                s_ref[pl.ds(t * C2, C2), :] = u.astype(_BF16)
            else:
                tap = pltpu.roll(u, shift, axis=1) * masks[j:j + 1]
                s_ref[pl.ds(t * C2, C2), :] = tap.astype(_BF16)
                j += 1
        return s_ref[...]

    h = jnp.dot(w1_ref[...], im2col(xn), preferred_element_type=_F32) + b1_ref[...]
    h = jnp.maximum(h, 0.0)
    h = jnp.dot(w2_ref[...], im2col(h), preferred_element_type=_F32) + b2_ref[...]

    # ---- unnorm ----
    o_ref[...] = h * std + mean


def _cnn_call(x, masks, w1m, b1m, w2m, b2m, H, W):
    B, C2, HW = x.shape
    K = w1m.shape[1]

    roll_like_jnp = _roll_like_jnp()
    shifts = []
    for dy in (-1, 0, 1):
        for dx in (-1, 0, 1):
            if dy == 0 and dx == 0:
                shifts.append(None)
            else:
                off = dy * W + dx
                shifts.append(((-off) if roll_like_jnp else off) % HW)
    kern = functools.partial(_cnn_kernel, shifts=tuple(shifts))

    dat_spec = pl.BlockSpec((None, C2, HW), lambda b: (b, 0, 0))
    msk_spec = pl.BlockSpec((8, HW), lambda b: (0, 0))
    w_spec = pl.BlockSpec((C2, K), lambda b: (0, 0))
    b_spec = pl.BlockSpec((C2, 1), lambda b: (0, 0))
    flops = int(2 * 2 * B * C2 * K * HW + 10 * B * C2 * HW)
    bytes_acc = int(2 * 4 * B * C2 * HW + 4 * 8 * HW + 2 * 2 * C2 * K)
    return pl.pallas_call(
        kern,
        out_shape=jax.ShapeDtypeStruct((B, C2, HW), _F32),
        grid_spec=pltpu.PrefetchScalarGridSpec(
            num_scalar_prefetch=0,
            grid=(B,),
            in_specs=[dat_spec, msk_spec, w_spec, b_spec, w_spec, b_spec],
            out_specs=dat_spec,
            scratch_shapes=[pltpu.VMEM((K, HW), _BF16)]),
        compiler_params=pltpu.CompilerParams(
            dimension_semantics=("parallel",),
            vmem_limit_bytes=_VMEM_LIMIT),
        cost_estimate=pl.CostEstimate(flops=flops, transcendentals=int(2 * B * C2),
                                      bytes_accessed=bytes_acc),
    )(x, masks, w1m, b1m, w2m, b2m)


# --------------------------------------------------------------------------
# kernel 3: sens-expand + centered fft2 (grid = (B, N), both parallel)
# --------------------------------------------------------------------------
def _expand_fft2_kernel(mwr_ref, mwi_ref, mhr_ref, mhi_ref,
                        img_ref, sr_ref, si_ref, or_ref, oi_ref,
                        *, C, H, W):
    img = img_ref[...]                            # (2C, H, W) f32, resident across N
    sr = sr_ref[...].astype(_F32)                 # (C, H, W)
    si = si_ref[...].astype(_F32)
    ir = img[:C]
    ii = img[C:]
    pr = (sr * ir - si * ii).reshape(C * H, W).astype(_BF16)   # sens * img
    pi = (sr * ii + si * ir).reshape(C * H, W).astype(_BF16)

    mwr = mwr_ref[...]
    mwi = mwi_ref[...]
    # centered fft along W: right-multiply by MW^T
    qr = (jnp.dot(pr, mwr, preferred_element_type=_F32)
          - jnp.dot(pi, mwi, preferred_element_type=_F32))
    qi = (jnp.dot(pr, mwi, preferred_element_type=_F32)
          + jnp.dot(pi, mwr, preferred_element_type=_F32))

    mhr = mhr_ref[...]
    mhi = mhi_ref[...]
    for c in range(C):                            # centered fft along H per contrast
        qrc = qr[c * H:(c + 1) * H, :].astype(_BF16)
        qic = qi[c * H:(c + 1) * H, :].astype(_BF16)
        or_ref[c] = (jnp.dot(mhr, qrc, preferred_element_type=_F32)
                     - jnp.dot(mhi, qic, preferred_element_type=_F32))
        oi_ref[c] = (jnp.dot(mhr, qic, preferred_element_type=_F32)
                     + jnp.dot(mhi, qrc, preferred_element_type=_F32))


def _expand_fft2_call(mwr, mwi, mhr, mhi, img, sr, si):
    B, C, N, H, W = sr.shape
    C2 = 2 * C
    mw_spec = pl.BlockSpec((W, W), lambda b, n: (0, 0))
    mh_spec = pl.BlockSpec((H, H), lambda b, n: (0, 0))
    img_spec = pl.BlockSpec((None, C2, H, W), lambda b, n: (b, 0, 0, 0))
    coil_spec = pl.BlockSpec((None, C, None, H, W), lambda b, n: (b, 0, n, 0, 0))
    kern = functools.partial(_expand_fft2_kernel, C=C, H=H, W=W)
    flops = int(2 * B * N * 4 * (C * H * W * W + C * H * H * W) + 8 * B * N * C * H * W)
    bytes_acc = int(2 * B * N * C * H * W * 2 + 4 * B * C2 * H * W
                    + 2 * 4 * B * N * C * H * W + 2 * 2 * (H * H + W * W))
    return pl.pallas_call(
        kern,
        out_shape=(jax.ShapeDtypeStruct((B, C, N, H, W), _F32),) * 2,
        grid_spec=pltpu.PrefetchScalarGridSpec(
            num_scalar_prefetch=0,
            grid=(B, N),
            in_specs=[mw_spec, mw_spec, mh_spec, mh_spec,
                      img_spec, coil_spec, coil_spec],
            out_specs=[coil_spec, coil_spec]),
        compiler_params=pltpu.CompilerParams(
            dimension_semantics=("parallel", "parallel"),
            vmem_limit_bytes=_VMEM_LIMIT),
        cost_estimate=pl.CostEstimate(flops=flops, transcendentals=0,
                                      bytes_accessed=bytes_acc),
    )(mwr, mwi, mhr, mhi, img, sr, si)


# --------------------------------------------------------------------------
# full forward pass
# --------------------------------------------------------------------------
def varnet_block(k_space, sensitivities, w1, b1, w2, b2):
    B, C, N, H, W = k_space.shape
    C2 = 2 * C
    HW = H * W

    # real/imag planes of the big arrays as bf16 (they are MXU operands only);
    # halves HBM traffic of the largest inputs.
    kr = jnp.real(k_space).astype(_BF16)
    ki = jnp.imag(k_space).astype(_BF16)
    sr = jnp.real(sensitivities).astype(_BF16)
    si = jnp.imag(sensitivities).astype(_BF16)

    # centered DFT matrices: right-mult form (transposed) for W, left-mult for H.
    def planes(m):
        return jnp.real(m).astype(_BF16), jnp.imag(m).astype(_BF16)

    mwi_r, mwi_i = planes(_centered_dft_matrix(W, inverse=True).T)
    mhi_r, mhi_i = planes(_centered_dft_matrix(H, inverse=True))
    mwf_r, mwf_i = planes(_centered_dft_matrix(W, inverse=False).T)
    mhf_r, mhf_i = planes(_centered_dft_matrix(H, inverse=False))

    # ---- kernel 1: ifft2 + coil combine -> (B, 2C, H, W) ----
    comb = _ifft2_combine_call(mwi_r, mwi_i, mhi_r, mhi_i, kr, ki, sr, si)

    # ---- kernel 2: norm -> conv3x3 -> ReLU -> conv3x3 -> unnorm ----
    w1m = jnp.transpose(w1, (0, 2, 3, 1)).reshape(C2, 9 * C2).astype(_BF16)
    w2m = jnp.transpose(w2, (0, 2, 3, 1)).reshape(C2, 9 * C2).astype(_BF16)
    b1m = b1.reshape(C2, 1).astype(_F32)
    b2m = b2.reshape(C2, 1).astype(_F32)
    masks = _edge_masks(H, W)
    y = _cnn_call(comb.reshape(B, C2, HW), masks, w1m, b1m, w2m, b2m, H, W)

    # ---- kernel 3: sens-expand + fft2 -> k-space ----
    out_r, out_i = _expand_fft2_call(mwf_r, mwf_i, mhf_r, mhf_i,
                                     y.reshape(B, C2, H, W), sr, si)
    return lax.complex(out_r, out_i)


# --------------------------------------------------------------------------
# pure-JAX reference mirroring the PyTorch forward pass
# --------------------------------------------------------------------------
def varnet_block_reference(k_space, sensitivities, w1, b1, w2, b2):
    C = k_space.shape[1]
    img = jnp.fft.fftshift(
        jnp.fft.ifftn(jnp.fft.ifftshift(k_space, axes=(-2, -1)),
                      axes=(-2, -1), norm="ortho"), axes=(-2, -1))
    comb = jnp.sum(img * jnp.conj(sensitivities), axis=2)          # (B, C, H, W)
    x = jnp.concatenate([comb.real, comb.imag], axis=1)            # (B, 2C, H, W)
    mean = jnp.mean(x, axis=(2, 3), keepdims=True)
    std = jnp.std(x, axis=(2, 3), keepdims=True, ddof=1)
    xn = (x - mean) / std
    dn = ("NCHW", "OIHW", "NCHW")
    y = lax.conv_general_dilated(xn, w1, (1, 1), "SAME",
                                 dimension_numbers=dn) + b1[None, :, None, None]
    y = jnp.maximum(y, 0.0)
    y = lax.conv_general_dilated(y, w2, (1, 1), "SAME",
                                 dimension_numbers=dn) + b2[None, :, None, None]
    y = y * std + mean
    comp = lax.complex(y[:, :C], y[:, C:])                         # (B, C, H, W)
    out = sensitivities * comp[:, :, None]
    out = jnp.fft.fftshift(
        jnp.fft.fftn(jnp.fft.ifftshift(out, axes=(-2, -1)),
                     axes=(-2, -1), norm="ortho"), axes=(-2, -1))
    return out


if __name__ == "__main__":
    B, C, N, H, W = 2, 2, 4, 16, 16   # batch, contrasts, coils, rows, cols
    C2 = 2 * C
    key = jax.random.PRNGKey(0)
    k = jax.random.split(key, 6)
    k_space = lax.complex(
        jax.random.normal(k[0], (B, C, N, H, W), jnp.float32),
        jax.random.normal(k[1], (B, C, N, H, W), jnp.float32))
    sens = lax.complex(
        jax.random.normal(k[2], (B, C, N, H, W), jnp.float32),
        jax.random.normal(k[3], (B, C, N, H, W), jnp.float32))

    # deterministic "model" (conv3x3 -> ReLU -> conv3x3) parameters
    w1 = 0.2 * jax.random.normal(k[4], (C2, C2, 3, 3), jnp.float32)
    b1 = 0.05 * jnp.arange(C2, dtype=jnp.float32) - 0.1
    w2 = 0.2 * jax.random.normal(k[5], (C2, C2, 3, 3), jnp.float32)
    b2 = 0.03 * jnp.arange(C2, dtype=jnp.float32)

    out = jax.block_until_ready(varnet_block(k_space, sens, w1, b1, w2, b2))
    ref = varnet_block_reference(k_space, sens, w1, b1, w2, b2)
    rel_err = float(jnp.max(jnp.abs(out - ref)) / (jnp.max(jnp.abs(ref)) + 1e-8))
    # bf16 inputs / MXU operands with f32 accumulation -> relaxed tolerance.
    assert rel_err < 3e-2, f"kernel/reference mismatch, rel max err = {rel_err}"
    print("KERNEL_OK")
</pallas_src>

<mosaic_0001>
module attributes {stable_mosaic.version = 11 : i64} {
  func.func @_ifft2_combine_kernel(%arg0: i32, %arg1: i32, %arg2: memref<16x16xbf16, #tpu.memory_space<vmem>>, %arg3: memref<16x16xbf16, #tpu.memory_space<vmem>>, %arg4: memref<16x16xbf16, #tpu.memory_space<vmem>>, %arg5: memref<16x16xbf16, #tpu.memory_space<vmem>>, %arg6: memref<1x2x1x16x16xbf16, #tpu.memory_space<vmem>>, %arg7: memref<1x2x1x16x16xbf16, #tpu.memory_space<vmem>>, %arg8: memref<1x2x1x16x16xbf16, #tpu.memory_space<vmem>>, %arg9: memref<1x2x1x16x16xbf16, #tpu.memory_space<vmem>>, %arg10: memref<1x4x16x16xf32, #tpu.memory_space<vmem>>) attributes {dimension_semantics = [#tpu.dimension_semantics<parallel>, #tpu.dimension_semantics<arbitrary>], iteration_bounds = array<i64: 2, 4>, scalar_prefetch = 0 : i64, scratch_operands = 0 : i64, tpu.core_type = #tpu.core_type<tc>, window_params = [{pipeline_mode = #tpu.pipeline_mode<synchronous>, transform_indices = @transform_0, window_bounds = array<i64: 16, 16>}, {pipeline_mode = #tpu.pipeline_mode<synchronous>, transform_indices = @transform_1, window_bounds = array<i64: 16, 16>}, {pipeline_mode = #tpu.pipeline_mode<synchronous>, transform_indices = @transform_2, window_bounds = array<i64: 16, 16>}, {pipeline_mode = #tpu.pipeline_mode<synchronous>, transform_indices = @transform_3, window_bounds = array<i64: 16, 16>}, {transform_indices = @transform_4, window_bounds = array<i64: 1, 2, 1, 16, 16>}, {transform_indices = @transform_5, window_bounds = array<i64: 1, 2, 1, 16, 16>}, {transform_indices = @transform_6, window_bounds = array<i64: 1, 2, 1, 16, 16>}, {transform_indices = @transform_7, window_bounds = array<i64: 1, 2, 1, 16, 16>}, {transform_indices = @transform_8, window_bounds = array<i64: 1, 4, 16, 16>}]} {
    %c0 = arith.constant 0 : index
    %c0_0 = arith.constant 0 : index
    %c0_1 = arith.constant 0 : index
    %c0_2 = arith.constant 0 : index
    %c0_3 = arith.constant 0 : index
    %0 = vector.load %arg6[%c0, %c0_0, %c0_1, %c0_2, %c0_3] : memref<1x2x1x16x16xbf16, #tpu.memory_space<vmem>>, vector<1x2x1x16x16xbf16>
    %1 = vector.shape_cast %0 : vector<1x2x1x16x16xbf16> to vector<2x16x16xbf16>
    %2 = vector.shape_cast %1 : vector<2x16x16xbf16> to vector<32x16xbf16>
    %c0_4 = arith.constant 0 : index
    %c0_5 = arith.constant 0 : index
    %c0_6 = arith.constant 0 : index
    %c0_7 = arith.constant 0 : index
    %c0_8 = arith.constant 0 : index
    %3 = vector.load %arg7[%c0_4, %c0_5, %c0_6, %c0_7, %c0_8] : memref<1x2x1x16x16xbf16, #tpu.memory_space<vmem>>, vector<1x2x1x16x16xbf16>
    %4 = vector.shape_cast %3 : vector<1x2x1x16x16xbf16> to vector<2x16x16xbf16>
    %5 = vector.shape_cast %4 : vector<2x16x16xbf16> to vector<32x16xbf16>
    %c0_9 = arith.constant 0 : index
    %c0_10 = arith.constant 0 : index
    %6 = vector.load %arg2[%c0_9, %c0_10] : memref<16x16xbf16, #tpu.memory_space<vmem>>, vector<16x16xbf16>
    %c0_11 = arith.constant 0 : index
    %c0_12 = arith.constant 0 : index
    %7 = vector.load %arg3[%c0_11, %c0_12] : memref<16x16xbf16, #tpu.memory_space<vmem>>, vector<16x16xbf16>
    %cst = arith.constant dense<0.000000e+00> : vector<32x16xf32>
    %8 = tpu.matmul %2, %6, %cst {dimension_numbers = #tpu.dot_dimension_numbers<[1], [0], [0], [1], [0, 0, 1, 1], [], []>} : vector<32x16xbf16>, vector<16x16xbf16>, vector<32x16xf32> -> vector<32x16xf32>
    %cst_13 = arith.constant dense<0.000000e+00> : vector<32x16xf32>
    %9 = tpu.matmul %5, %7, %cst_13 {dimension_numbers = #tpu.dot_dimension_numbers<[1], [0], [0], [1], [0, 0, 1, 1], [], []>} : vector<32x16xbf16>, vector<16x16xbf16>, vector<32x16xf32> -> vector<32x16xf32>
    %10 = arith.subf %8, %9 : vector<32x16xf32>
    %cst_14 = arith.constant dense<0.000000e+00> : vector<32x16xf32>
    %11 = tpu.matmul %2, %7, %cst_14 {dimension_numbers = #tpu.dot_dimension_numbers<[1], [0], [0], [1], [0, 0, 1, 1], [], []>} : vector<32x16xbf16>, vector<16x16xbf16>, vector<32x16xf32> -> vector<32x16xf32>
    %cst_15 = arith.constant dense<0.000000e+00> : vector<32x16xf32>
    %12 = tpu.matmul %5, %6, %cst_15 {dimension_numbers = #tpu.dot_dimension_numbers<[1], [0], [0], [1], [0, 0, 1, 1], [], []>} : vector<32x16xbf16>, vector<16x16xbf16>, vector<32x16xf32> -> vector<32x16xf32>
    %13 = arith.addf %11, %12 : vector<32x16xf32>
    %c0_16 = arith.constant 0 : index
    %c0_17 = arith.constant 0 : index
    %14 = vector.load %arg4[%c0_16, %c0_17] : memref<16x16xbf16, #tpu.memory_space<vmem>>, vector<16x16xbf16>
    %c0_18 = arith.constant 0 : index
    %c0_19 = arith.constant 0 : index
    %15 = vector.load %arg5[%c0_18, %c0_19] : memref<16x16xbf16, #tpu.memory_space<vmem>>, vector<16x16xbf16>
    %c0_20 = arith.constant 0 : index
    %c0_21 = arith.constant 0 : index
    %c0_22 = arith.constant 0 : index
    %c0_23 = arith.constant 0 : index
    %c0_24 = arith.constant 0 : index
    %16 = vector.load %arg8[%c0_20, %c0_21, %c0_22, %c0_23, %c0_24] : memref<1x2x1x16x16xbf16, #tpu.memory_space<vmem>>, vector<1x2x1x16x16xbf16>
    %17 = vector.shape_cast %16 : vector<1x2x1x16x16xbf16> to vector<2x16x16xbf16>
    %c0_25 = arith.constant 0 : index
    %c0_26 = arith.constant 0 : index
    %c0_27 = arith.constant 0 : index
    %c0_28 = arith.constant 0 : index
    %c0_29 = arith.constant 0 : index
    %18 = vector.load %arg9[%c0_25, %c0_26, %c0_27, %c0_28, %c0_29] : memref<1x2x1x16x16xbf16, #tpu.memory_space<vmem>>, vector<1x2x1x16x16xbf16>
    %19 = vector.shape_cast %18 : vector<1x2x1x16x16xbf16> to vector<2x16x16xbf16>
    %20 = vector.extract_strided_slice %10 {offsets = [0, 0], sizes = [16, 16], strides = [1, 1]} : vector<32x16xf32> to vector<16x16xf32>
    %21 = arith.truncf %20 : vector<16x16xf32> to vector<16x16xbf16>
    %22 = vector.extract_strided_slice %13 {offsets = [0, 0], sizes = [16, 16], strides = [1, 1]} : vector<32x16xf32> to vector<16x16xf32>
    %23 = arith.truncf %22 : vector<16x16xf32> to vector<16x16xbf16>
    %cst_30 = arith.constant dense<0.000000e+00> : vector<16x16xf32>
    %24 = tpu.matmul %14, %21, %cst_30 {dimension_numbers = #tpu.dot_dimension_numbers<[1], [0], [0], [1], [0, 0, 1, 1], [], []>} : vector<16x16xbf16>, vector<16x16xbf16>, vector<16x16xf32> -> vector<16x16xf32>
    %cst_31 = arith.constant dense<0.000000e+00> : vector<16x16xf32>
    %25 = tpu.matmul %15, %23, %cst_31 {dimension_numbers = #tpu.dot_dimension_numbers<[1], [0], [0], [1], [0, 0, 1, 1], [], []>} : vector<16x16xbf16>, vector<16x16xbf16>, vector<16x16xf32> -> vector<16x16xf32>
    %26 = arith.subf %24, %25 : vector<16x16xf32>
    %cst_32 = arith.constant dense<0.000000e+00> : vector<16x16xf32>
    %27 = tpu.matmul %14, %23, %cst_32 {dimension_numbers = #tpu.dot_dimension_numbers<[1], [0], [0], [1], [0, 0, 1, 1], [], []>} : vector<16x16xbf16>, vector<16x16xbf16>, vector<16x16xf32> -> vector<16x16xf32>
    %cst_33 = arith.constant dense<0.000000e+00> : vector<16x16xf32>
    %28 = tpu.matmul %15, %21, %cst_33 {dimension_numbers = #tpu.dot_dimension_numbers<[1], [0], [0], [1], [0, 0, 1, 1], [], []>} : vector<16x16xbf16>, vector<16x16xbf16>, vector<16x16xf32> -> vector<16x16xf32>
    %29 = arith.addf %27, %28 : vector<16x16xf32>
    %30 = vector.extract_strided_slice %17 {offsets = [0, 0, 0], sizes = [1, 16, 16], strides = [1, 1, 1]} : vector<2x16x16xbf16> to vector<1x16x16xbf16>
    %31 = vector.shape_cast %30 : vector<1x16x16xbf16> to vector<16x16xbf16>
    %32 = arith.extf %31 : vector<16x16xbf16> to vector<16x16xf32>
    %33 = vector.extract_strided_slice %19 {offsets = [0, 0, 0], sizes = [1, 16, 16], strides = [1, 1, 1]} : vector<2x16x16xbf16> to vector<1x16x16xbf16>
    %34 = vector.shape_cast %33 : vector<1x16x16xbf16> to vector<16x16xbf16>
    %35 = arith.extf %34 : vector<16x16xbf16> to vector<16x16xf32>
    %36 = arith.mulf %26, %32 : vector<16x16xf32>
    %37 = arith.mulf %29, %35 : vector<16x16xf32>
    %38 = arith.addf %36, %37 : vector<16x16xf32>
    %39 = arith.mulf %29, %32 : vector<16x16xf32>
    %40 = arith.mulf %26, %35 : vector<16x16xf32>
    %41 = arith.subf %39, %40 : vector<16x16xf32>
    %42 = vector.extract_strided_slice %10 {offsets = [16, 0], sizes = [16, 16], strides = [1, 1]} : vector<32x16xf32> to vector<16x16xf32>
    %43 = arith.truncf %42 : vector<16x16xf32> to vector<16x16xbf16>
    %44 = vector.extract_strided_slice %13 {offsets = [16, 0], sizes = [16, 16], strides = [1, 1]} : vector<32x16xf32> to vector<16x16xf32>
    %45 = arith.truncf %44 : vector<16x16xf32> to vector<16x16xbf16>
    %cst_34 = arith.constant dense<0.000000e+00> : vector<16x16xf32>
    %46 = tpu.matmul %14, %43, %cst_34 {dimension_numbers = #tpu.dot_dimension_numbers<[1], [0], [0], [1], [0, 0, 1, 1], [], []>} : vector<16x16xbf16>, vector<16x16xbf16>, vector<16x16xf32> -> vector<16x16xf32>
    %cst_35 = arith.constant dense<0.000000e+00> : vector<16x16xf32>
    %47 = tpu.matmul %15, %45, %cst_35 {dimension_numbers = #tpu.dot_dimension_numbers<[1], [0], [0], [1], [0, 0, 1, 1], [], []>} : vector<16x16xbf16>, vector<16x16xbf16>, vector<16x16xf32> -> vector<16x16xf32>
    %48 = arith.subf %46, %47 : vector<16x16xf32>
    %cst_36 = arith.constant dense<0.000000e+00> : vector<16x16xf32>
    %49 = tpu.matmul %14, %45, %cst_36 {dimension_numbers = #tpu.dot_dimension_numbers<[1], [0], [0], [1], [0, 0, 1, 1], [], []>} : vector<16x16xbf16>, vector<16x16xbf16>, vector<16x16xf32> -> vector<16x16xf32>
    %cst_37 = arith.constant dense<0.000000e+00> : vector<16x16xf32>
    %50 = tpu.matmul %15, %43, %cst_37 {dimension_numbers = #tpu.dot_dimension_numbers<[1], [0], [0], [1], [0, 0, 1, 1], [], []>} : vector<16x16xbf16>, vector<16x16xbf16>, vector<16x16xf32> -> vector<16x16xf32>
    %51 = arith.addf %49, %50 : vector<16x16xf32>
    %52 = vector.extract_strided_slice %17 {offsets = [1, 0, 0], sizes = [1, 16, 16], strides = [1, 1, 1]} : vector<2x16x16xbf16> to vector<1x16x16xbf16>
    %53 = vector.shape_cast %52 : vector<1x16x16xbf16> to vector<16x16xbf16>
    %54 = arith.extf %53 : vector<16x16xbf16> to vector<16x16xf32>
    %55 = vector.extract_strided_slice %19 {offsets = [1, 0, 0], sizes = [1, 16, 16], strides = [1, 1, 1]} : vector<2x16x16xbf16> to vector<1x16x16xbf16>
    %56 = vector.shape_cast %55 : vector<1x16x16xbf16> to vector<16x16xbf16>
    %57 = arith.extf %56 : vector<16x16xbf16> to vector<16x16xf32>
    %58 = arith.mulf %48, %54 : vector<16x16xf32>
    %59 = arith.mulf %51, %57 : vector<16x16xf32>
    %60 = arith.addf %58, %59 : vector<16x16xf32>
    %61 = arith.mulf %51, %54 : vector<16x16xf32>
    %62 = arith.mulf %48, %57 : vector<16x16xf32>
    %63 = arith.subf %61, %62 : vector<16x16xf32>
    %c0_i32 = arith.constant 0 : i32
    %64 = arith.cmpi eq, %arg1, %c0_i32 : i32
    %65 = arith.extui %64 : i1 to i32
    %c0_i32_38 = arith.constant 0 : i32
    %66 = arith.cmpi ne, %65, %c0_i32_38 : i32
    scf.if %66 {
      %c0_41 = arith.constant 0 : index
      %c0_42 = arith.constant 0 : index
      %c0_43 = arith.constant 0 : index
      %c0_44 = arith.constant 0 : index
      %70 = vector.load %arg10[%c0_41, %c0_42, %c0_43, %c0_44] : memref<1x4x16x16xf32, #tpu.memory_space<vmem>>, vector<1x1x16x16xf32>
      %71 = vector.shape_cast %70 : vector<1x1x16x16xf32> to vector<16x16xf32>
      %72 = vector.shape_cast %38 : vector<16x16xf32> to vector<1x1x16x16xf32>
      tpu.vector_store %arg10[%c0_41, %c0_42, %c0_43, %c0_44], %72 {strides = array<i32>} : memref<1x4x16x16xf32, #tpu.memory_space<vmem>>, vector<1x1x16x16xf32>,
      %c0_45 = arith.constant 0 : index
      %c2 = arith.constant 2 : index
      %c0_46 = arith.constant 0 : index
      %c0_47 = arith.constant 0 : index
      %73 = vector.load %arg10[%c0_45, %c2, %c0_46, %c0_47] : memref<1x4x16x16xf32, #tpu.memory_space<vmem>>, vector<1x1x16x16xf32>
      %74 = vector.shape_cast %73 : vector<1x1x16x16xf32> to vector<16x16xf32>
      %75 = vector.shape_cast %41 : vector<16x16xf32> to vector<1x1x16x16xf32>
      tpu.vector_store %arg10[%c0_45, %c2, %c0_46, %c0_47], %75 {strides = array<i32>} : memref<1x4x16x16xf32, #tpu.memory_space<vmem>>, vector<1x1x16x16xf32>,
      %c0_48 = arith.constant 0 : index
      %c1 = arith.constant 1 : index
      %c0_49 = arith.constant 0 : index
      %c0_50 = arith.constant 0 : index
      %76 = vector.load %arg10[%c0_48, %c1, %c0_49, %c0_50] : memref<1x4x16x16xf32, #tpu.memory_space<vmem>>, vector<1x1x16x16xf32>
      %77 = vector.shape_cast %76 : vector<1x1x16x16xf32> to vector<16x16xf32>
      %78 = vector.shape_cast %60 : vector<16x16xf32> to vector<1x1x16x16xf32>
      tpu.vector_store %arg10[%c0_48, %c1, %c0_49, %c0_50], %78 {strides = array<i32>} : memref<1x4x16x16xf32, #tpu.memory_space<vmem>>, vector<1x1x16x16xf32>,
      %c0_51 = arith.constant 0 : index
      %c3 = arith.constant 3 : index
      %c0_52 = arith.constant 0 : index
      %c0_53 = arith.constant 0 : index
      %79 = vector.load %arg10[%c0_51, %c3, %c0_52, %c0_53] : memref<1x4x16x16xf32, #tpu.memory_space<vmem>>, vector<1x1x16x16xf32>
      %80 = vector.shape_cast %79 : vector<1x1x16x16xf32> to vector<16x16xf32>
      %81 = vector.shape_cast %63 : vector<16x16xf32> to vector<1x1x16x16xf32>
      tpu.vector_store %arg10[%c0_51, %c3, %c0_52, %c0_53], %81 {strides = array<i32>} : memref<1x4x16x16xf32, #tpu.memory_space<vmem>>, vector<1x1x16x16xf32>,
    } else {
    }
    %c0_i32_39 = arith.constant 0 : i32
    %67 = arith.cmpi ne, %arg1, %c0_i32_39 : i32
    %68 = arith.extui %67 : i1 to i32
    %c0_i32_40 = arith.constant 0 : i32
    %69 = arith.cmpi ne, %68, %c0_i32_40 : i32
    scf.if %69 {
      %c0_41 = arith.constant 0 : index
      %c0_42 = arith.constant 0 : index
      %c0_43 = arith.constant 0 : index
      %c0_44 = arith.constant 0 : index
      %70 = vector.load %arg10[%c0_41, %c0_42, %c0_43, %c0_44] : memref<1x4x16x16xf32, #tpu.memory_space<vmem>>, vector<1x1x16x16xf32>
      %71 = vector.shape_cast %70 : vector<1x1x16x16xf32> to vector<16x16xf32>
      %72 = arith.addf %71, %38 : vector<16x16xf32>
      %c0_45 = arith.constant 0 : index
      %c0_46 = arith.constant 0 : index
      %c0_47 = arith.constant 0 : index
      %c0_48 = arith.constant 0 : index
      %73 = vector.load %arg10[%c0_45, %c0_46, %c0_47, %c0_48] : memref<1x4x16x16xf32, #tpu.memory_space<vmem>>, vector<1x1x16x16xf32>
      %74 = vector.shape_cast %73 : vector<1x1x16x16xf32> to vector<16x16xf32>
      %75 = vector.shape_cast %72 : vector<16x16xf32> to vector<1x1x16x16xf32>
      tpu.vector_store %arg10[%c0_45, %c0_46, %c0_47, %c0_48], %75 {strides = array<i32>} : memref<1x4x16x16xf32, #tpu.memory_space<vmem>>, vector<1x1x16x16xf32>,
      %c0_49 = arith.constant 0 : index
      %c2 = arith.constant 2 : index
      %c0_50 = arith.constant 0 : index
      %c0_51 = arith.constant 0 : index
      %76 = vector.load %arg10[%c0_49, %c2, %c0_50, %c0_51] : memref<1x4x16x16xf32, #tpu.memory_space<vmem>>, vector<1x1x16x16xf32>
      %77 = vector.shape_cast %76 : vector<1x1x16x16xf32> to vector<16x16xf32>
      %78 = arith.addf %77, %41 : vector<16x16xf32>
      %c0_52 = arith.constant 0 : index
      %c2_53 = arith.constant 2 : index
      %c0_54 = arith.constant 0 : index
      %c0_55 = arith.constant 0 : index
      %79 = vector.load %arg10[%c0_52, %c2_53, %c0_54, %c0_55] : memref<1x4x16x16xf32, #tpu.memory_space<vmem>>, vector<1x1x16x16xf32>
      %80 = vector.shape_cast %79 : vector<1x1x16x16xf32> to vector<16x16xf32>
      %81 = vector.shape_cast %78 : vector<16x16xf32> to vector<1x1x16x16xf32>
      tpu.vector_store %arg10[%c0_52, %c2_53, %c0_54, %c0_55], %81 {strides = array<i32>} : memref<1x4x16x16xf32, #tpu.memory_space<vmem>>, vector<1x1x16x16xf32>,
      %c0_56 = arith.constant 0 : index
      %c1 = arith.constant 1 : index
      %c0_57 = arith.constant 0 : index
      %c0_58 = arith.constant 0 : index
      %82 = vector.load %arg10[%c0_56, %c1, %c0_57, %c0_58] : memref<1x4x16x16xf32, #tpu.memory_space<vmem>>, vector<1x1x16x16xf32>
      %83 = vector.shape_cast %82 : vector<1x1x16x16xf32> to vector<16x16xf32>
      %84 = arith.addf %83, %60 : vector<16x16xf32>
      %c0_59 = arith.constant 0 : index
      %c1_60 = arith.constant 1 : index
      %c0_61 = arith.constant 0 : index
      %c0_62 = arith.constant 0 : index
      %85 = vector.load %arg10[%c0_59, %c1_60, %c0_61, %c0_62] : memref<1x4x16x16xf32, #tpu.memory_space<vmem>>, vector<1x1x16x16xf32>
      %86 = vector.shape_cast %85 : vector<1x1x16x16xf32> to vector<16x16xf32>
      %87 = vector.shape_cast %84 : vector<16x16xf32> to vector<1x1x16x16xf32>
      tpu.vector_store %arg10[%c0_59, %c1_60, %c0_61, %c0_62], %87 {strides = array<i32>} : memref<1x4x16x16xf32, #tpu.memory_space<vmem>>, vector<1x1x16x16xf32>,
      %c0_63 = arith.constant 0 : index
      %c3 = arith.constant 3 : index
      %c0_64 = arith.constant 0 : index
      %c0_65 = arith.constant 0 : index
      %88 = vector.load %arg10[%c0_63, %c3, %c0_64, %c0_65] : memref<1x4x16x16xf32, #tpu.memory_space<vmem>>, vector<1x1x16x16xf32>
      %89 = vector.shape_cast %88 : vector<1x1x16x16xf32> to vector<16x16xf32>
      %90 = arith.addf %89, %63 : vector<16x16xf32>
      %c0_66 = arith.constant 0 : index
      %c3_67 = arith.constant 3 : index
      %c0_68 = arith.constant 0 : index
      %c0_69 = arith.constant 0 : index
      %91 = vector.load %arg10[%c0_66, %c3_67, %c0_68, %c0_69] : memref<1x4x16x16xf32, #tpu.memory_space<vmem>>, vector<1x1x16x16xf32>
      %92 = vector.shape_cast %91 : vector<1x1x16x16xf32> to vector<16x16xf32>
      %93 = vector.shape_cast %90 : vector<16x16xf32> to vector<1x1x16x16xf32>
      tpu.vector_store %arg10[%c0_66, %c3_67, %c0_68, %c0_69], %93 {strides = array<i32>} : memref<1x4x16x16xf32, #tpu.memory_space<vmem>>, vector<1x1x16x16xf32>,
    } else {
    }
    return
  }
  func.func @transform_0(%arg0: i32, %arg1: i32) -> (i32, i32) {
    %c0_i32 = arith.constant 0 : i32
    %c0_i32_0 = arith.constant 0 : i32
    %c0_i32_1 = arith.constant 0 : i32
    return %c0_i32, %c0_i32_0 : i32, i32
  }
  func.func @transform_1(%arg0: i32, %arg1: i32) -> (i32, i32) {
    %c0_i32 = arith.constant 0 : i32
    %c0_i32_0 = arith.constant 0 : i32
    %c0_i32_1 = arith.constant 0 : i32
    return %c0_i32, %c0_i32_0 : i32, i32
  }
  func.func @transform_2(%arg0: i32, %arg1: i32) -> (i32, i32) {
    %c0_i32 = arith.constant 0 : i32
    %c0_i32_0 = arith.constant 0 : i32
    %c0_i32_1 = arith.constant 0 : i32
    return %c0_i32, %c0_i32_0 : i32, i32
  }
  func.func @transform_3(%arg0: i32, %arg1: i32) -> (i32, i32) {
    %c0_i32 = arith.constant 0 : i32
    %c0_i32_0 = arith.constant 0 : i32
    %c0_i32_1 = arith.constant 0 : i32
    return %c0_i32, %c0_i32_0 : i32, i32
  }
  func.func @transform_4(%arg0: i32, %arg1: i32) -> (i32, i32, i32, i32, i32) {
    %c0_i32 = arith.constant 0 : i32
    %c0_i32_0 = arith.constant 0 : i32
    %c0_i32_1 = arith.constant 0 : i32
    %c0_i32_2 = arith.constant 0 : i32
    return %arg0, %c0_i32, %arg1, %c0_i32_0, %c0_i32_1 : i32, i32, i32, i32, i32
  }
  func.func @transform_5(%arg0: i32, %arg1: i32) -> (i32, i32, i32, i32, i32) {
    %c0_i32 = arith.constant 0 : i32
    %c0_i32_0 = arith.constant 0 : i32
    %c0_i32_1 = arith.constant 0 : i32
    %c0_i32_2 = arith.constant 0 : i32
    return %arg0, %c0_i32, %arg1, %c0_i32_0, %c0_i32_1 : i32, i32, i32, i32, i32
  }
  func.func @transform_6(%arg0: i32, %arg1: i32) -> (i32, i32, i32, i32, i32) {
    %c0_i32 = arith.constant 0 : i32
    %c0_i32_0 = arith.constant 0 : i32
    %c0_i32_1 = arith.constant 0 : i32
    %c0_i32_2 = arith.constant 0 : i32
    return %arg0, %c0_i32, %arg1, %c0_i32_0, %c0_i32_1 : i32, i32, i32, i32, i32
  }
  func.func @transform_7(%arg0: i32, %arg1: i32) -> (i32, i32, i32, i32, i32) {
    %c0_i32 = arith.constant 0 : i32
    %c0_i32_0 = arith.constant 0 : i32
    %c0_i32_1 = arith.constant 0 : i32
    %c0_i32_2 = arith.constant 0 : i32
    return %arg0, %c0_i32, %arg1, %c0_i32_0, %c0_i32_1 : i32, i32, i32, i32, i32
  }
  func.func @transform_8(%arg0: i32, %arg1: i32) -> (i32, i32, i32, i32) {
    %c0_i32 = arith.constant 0 : i32
    %c0_i32_0 = arith.constant 0 : i32
    %c0_i32_1 = arith.constant 0 : i32
    %c0_i32_2 = arith.constant 0 : i32
    return %arg0, %c0_i32, %c0_i32_0, %c0_i32_1 : i32, i32, i32, i32
  }
}

</mosaic_0001>

<llo_original>
// kernel: tpu_custom_call.1
$region0: #{tpu_custom_call.1}
  #allocation0 [shape = 'u32[]', space=smem, size = 0x4, offset = 0x4, fixed_abs, tag = 'smem constant byte address 0x4 - core index']
  #allocation1 [shape = 'u32[72,128]{1,0:T(1,128)}', space=vmem, size = 0x9000, scoped, tag = 'internal scratch']
  #allocation15 [shape = 's32[]', space=sflag, size = 0x4, offset = 0, fixed_abs, tag = 'sflag constant byte address 0x0 - dummy sync flag']
  #allocation17 [shape = 's32[]', space=sflag, size = 0x4, offset = 0, fixed_abs, tag = 'sflag constant byte address 0x0 - dummy sync flag']
  #allocation19 [shape = 's32[]', space=sflag, size = 0x4, offset = 0, fixed_abs, tag = 'sflag constant byte address 0x0 - dummy sync flag']
  #allocation21 [shape = 's32[]', space=sflag, size = 0x4, offset = 0, fixed_abs, tag = 'sflag constant byte address 0x0 - dummy sync flag']
  %s0 = inlined_call_operand.hbm [shape: bf16[16,16], index: 0, kind: input, shape index: {}]
  %s1 = inlined_call_operand.hbm [shape: bf16[16,16], index: 1, kind: input, shape index: {}]
  %s2 = inlined_call_operand.hbm [shape: bf16[16,16], index: 2, kind: input, shape index: {}]
  %s3 = inlined_call_operand.hbm [shape: bf16[16,16], index: 3, kind: input, shape index: {}]
  %s4 = inlined_call_operand.hbm [shape: bf16[2,2,4,16,16], index: 4, kind: input, shape index: {}]
  %s5 = inlined_call_operand.hbm [shape: bf16[2,2,4,16,16], index: 5, kind: input, shape index: {}]
  %s6 = inlined_call_operand.hbm [shape: bf16[2,2,4,16,16], index: 6, kind: input, shape index: {}]
  %s7 = inlined_call_operand.hbm [shape: bf16[2,2,4,16,16], index: 7, kind: input, shape index: {}]
  %s8 = inlined_call_operand.hbm [shape: f32[2,4,16,16], index: 8, kind: output, shape index: {}]
  %s9 = sld [smem:[#allocation0]]
  $region105: #{tpu_custom_call.1} parent=0
    _
  %s11 = ssub.s32 1, %s9
  %s12 = scalar_select 0, %s11, %s9
  $region1: #{tpu_custom_call.1} parent=0
    #allocation2 [shape = 'u8[4096]{0}', space=vmem, size = 0x1000, scoped, tag = 'input window, operand 0, single buffered']
    #allocation3 [shape = 's32[2]{0}', space=sflag, size = 0x8, scoped, tag = 'scoped memory for tpu_custom_call.1']
    #allocation4 [shape = 's32[2]{0}', space=sflag, size = 0x8, scoped, tag = 'scoped memory for tpu_custom_call.1']
    #allocation5 [shape = 'u8[4096]{0}', space=vmem, size = 0x1000, scoped, tag = 'input window, operand 1, single buffered']
    #allocation6 [shape = 's32[1]{0}', space=sflag, size = 0x4, scoped, tag = 'scoped memory for tpu_custom_call.1']
    #allocation7 [shape = 'u8[4096]{0}', space=vmem, size = 0x1000, scoped, tag = 'input window, operand 2, single buffered']
    #allocation8 [shape = 'u8[4096]{0}', space=vmem, size = 0x1000, scoped, tag = 'input window, operand 3, single buffered']
    #allocation9 [shape = 's32[1]{0}', space=sflag, size = 0x4, scoped, tag = 'scoped memory for tpu_custom_call.1']
    #allocation10 [shape = 'u8[16384]{0}', space=vmem, size = 0x4000, scoped, tag = 'input window, operand 4']
    #allocation11 [shape = 'u8[16384]{0}', space=vmem, size = 0x4000, scoped, tag = 'input window, operand 5']
    #allocation12 [shape = 'u8[16384]{0}', space=vmem, size = 0x4000, scoped, tag = 'input window, operand 6']
    #allocation13 [shape = 'u8[16384]{0}', space=vmem, size = 0x4000, scoped, tag = 'input window, operand 7']
    #allocation14 [shape = 'u8[65536]{0}', space=vmem, size = 0x10000, scoped, tag = 'output window, operand 0']
    %13 = vsyncpa [#allocation3], 0
    %14 = vsyncpa [#allocation6], 0
    %15 = vsyncpa [#allocation9], 0
    %16 = vsyncpa [#allocation4], 0
    %s17 = scalar_lea.sflag [#allocation4], 1
    %18 = vsyncpa %s17, 0
    loop: start=0, step=1, limit=10
    $region2: #{tpu_custom_call.1} parent=1 // loop_pre_header
      _
    $region3: #{tpu_custom_call.1} parent=1 // loop_header
      %s20 = sphi 0, %s24
      %p21 = scmp.ge.s32.totalorder %s20, 10
      %s27 = sphi 0, %s39
      %s28 = sphi 0, %s35
      %s29 = sphi 0, %s27
      %s30 = sphi 0, %s28
      %s31 = sphi 0, %s29
      %s32 = sphi 0, %s30
      %s40 = sphi 0, %s40
      %s42 = sphi 0, %s40
      %s43 = sphi 0, %s42
      %s57 = sphi 0, %s43
      %s61 = sphi 0, %s61
      %s63 = sphi 0, %s61
      %s64 = sphi 0, %s63
      %s78 = sphi 0, %s64
      %s82 = sphi 0, %s82
      %s84 = sphi 0, %s82
      %s85 = sphi 0, %s84
      %s99 = sphi 0, %s85
      %s103 = sphi 0, %s103
      %s105 = sphi 0, %s103
      %s106 = sphi 0, %s105
      %s120 = sphi 0, %s106
      %s128 = sphi 0, %s130
      %s131 = sphi 0, %s128
      %s132 = sphi 0, %s131
      %s148 = sphi 0, %s132
      %s156 = sphi 0, %s158
      %s159 = sphi 0, %s156
      %s160 = sphi 0, %s159
      %s176 = sphi 0, %s160
      %s184 = sphi 0, %s186
      %s187 = sphi 0, %s184
      %s188 = sphi 0, %s187
      %s204 = sphi 0, %s188
      %s212 = sphi 0, %s214
      %s215 = sphi 0, %s212
      %s216 = sphi 0, %s215
      %s232 = sphi 0, %s216
      %s238 = sphi 0, %s240
      %s241 = sphi 0, %s238
      %s242 = sphi 0, %s241
      %s258 = sphi 0, %s242
    $region4: #{tpu_custom_call.1} parent=1 // loop_header_branch
      %23 = sbr.rel (%p21) target = $region8
    $region5: #{tpu_custom_call.1} parent=1 // loop_body
      %s25 = ssub.s32 %s20, 1
      %s26 = ssub.s32 %s20, 2
      %s33 = sadd.s32 1, %s28
      %p34 = scmp.ge.s32.totalorder %s33, 4
      %s35 = scalar_select %p34, 0, %s33
      %s36 = sadd.s32 1, %s27
      %s37 = scalar_select %p34, %s36, %s27
      %p38 = scmp.ge.s32.totalorder %s37, 2
      %s39 = scalar_select %p38, 0, %s37
      %s41 = sadd.s32 %s40, 1
      %p44 = scmp.eq.s32.totalorder %s20, 7
      %p45 = scmp.ne.s32.totalorder %s40, %s42
      %p46 = scmp.eq.s32.totalorder %s20, 0
      %p47 = por %p45, %p46
      %p48 = scmp.ne.s32.totalorder %s40, %s42
      %p49 = scmp.eq.s32.totalorder %s25, 7
      %p50 = por %p48, %p49
      %p51 = scmp.ne.s32.totalorder %s42, %s43
      %p52 = scmp.eq.s32.totalorder %s25, 0
      %p53 = por %p51, %p52
      %p54 = scmp.ne.s32.totalorder %s42, %s43
      %p55 = scmp.eq.s32.totalorder %s26, 7
      %p56 = por %p54, %p55
      %p58 = scmp.ne.s32.totalorder %s43, %s57
      %p59 = scmp.eq.s32.totalorder %s26, 0
      %p60 = por %p58, %p59
      %s62 = sadd.s32 %s61, 1
      %p65 = scmp.eq.s32.totalorder %s20, 7
      %p66 = scmp.ne.s32.totalorder %s61, %s63
      %p67 = scmp.eq.s32.totalorder %s20, 0
      %p68 = por %p66, %p67
      %p69 = scmp.ne.s32.totalorder %s61, %s63
      %p70 = scmp.eq.s32.totalorder %s25, 7
      %p71 = por %p69, %p70
      %p72 = scmp.ne.s32.totalorder %s63, %s64
      %p73 = scmp.eq.s32.totalorder %s25, 0
      %p74 = por %p72, %p73
      %p75 = scmp.ne.s32.totalorder %s63, %s64
      %p76 = scmp.eq.s32.totalorder %s26, 7
      %p77 = por %p75, %p76
      %p79 = scmp.ne.s32.totalorder %s64, %s78
      %p80 = scmp.eq.s32.totalorder %s26, 0
      %p81 = por %p79, %p80
      %s83 = sadd.s32 %s82, 1
      %p86 = scmp.eq.s32.totalorder %s20, 7
      %p87 = scmp.ne.s32.totalorder %s82, %s84
      %p88 = scmp.eq.s32.totalorder %s20, 0
      %p89 = por %p87, %p88
      %p90 = scmp.ne.s32.totalorder %s82, %s84
      %p91 = scmp.eq.s32.totalorder %s25, 7
      %p92 = por %p90, %p91
      %p93 = scmp.ne.s32.totalorder %s84, %s85
      %p94 = scmp.eq.s32.totalorder %s25, 0
      %p95 = por %p93, %p94
      %p96 = scmp.ne.s32.totalorder %s84, %s85
      %p97 = scmp.eq.s32.totalorder %s26, 7
      %p98 = por %p96, %p97
      %p100 = scmp.ne.s32.totalorder %s85, %s99
      %p101 = scmp.eq.s32.totalorder %s26, 0
      %p102 = por %p100, %p101
      %s104 = sadd.s32 %s103, 1
      %p107 = scmp.eq.s32.totalorder %s20, 7
      %p108 = scmp.ne.s32.totalorder %s103, %s105
      %p109 = scmp.eq.s32.totalorder %s20, 0
      %p110 = por %p108, %p109
      %p111 = scmp.ne.s32.totalorder %s103, %s105
      %p112 = scmp.eq.s32.totalorder %s25, 7
      %p113 = por %p111, %p112
      %p114 = scmp.ne.s32.totalorder %s105, %s106
      %p115 = scmp.eq.s32.totalorder %s25, 0
      %p116 = por %p114, %p115
      %p117 = scmp.ne.s32.totalorder %s105, %s106
      %p118 = scmp.eq.s32.totalorder %s26, 7
      %p119 = por %p117, %p118
      %p121 = scmp.ne.s32.totalorder %s106, %s120
      %p122 = scmp.eq.s32.totalorder %s26, 0
      %p123 = por %p121, %p122
      %s124 = ssub.s32 %s27, %s39
      %s125 = ssub.s32 %s28, %s35
      %s126 = sor.u32 %s124, %s125
      %p127 = scmp.eq.s32.totalorder %s126, 0
      %s129 = sadd.s32 %s128, 1
      %s130 = scalar_select %p127, %s128, %s129
      %p133 = pneg %p127
      %p134 = scmp.eq.s32.totalorder %s20, 7
      %p135 = por %p133, %p134
      %p136 = scmp.ne.s32.totalorder %s128, %s131
      %p137 = scmp.eq.s32.totalorder %s20, 0
      %p138 = por %p136, %p137
      %p139 = scmp.ne.s32.totalorder %s128, %s131
      %p140 = scmp.eq.s32.totalorder %s25, 7
      %p141 = por %p139, %p140
      %p142 = scmp.ne.s32.totalorder %s131, %s132
      %p143 = scmp.eq.s32.totalorder %s25, 0
      %p144 = por %p142, %p143
      %p145 = scmp.ne.s32.totalorder %s131, %s132
      %p146 = scmp.eq.s32.totalorder %s26, 7
      %p147 = por %p145, %p146
      %p149 = scmp.ne.s32.totalorder %s132, %s148
      %p150 = scmp.eq.s32.totalorder %s26, 0
      %p151 = por %p149, %p150
      %s152 = ssub.s32 %s27, %s39
      %s153 = ssub.s32 %s28, %s35
      %s154 = sor.u32 %s152, %s153
      %p155 = scmp.eq.s32.totalorder %s154, 0
      %s157 = sadd.s32 %s156, 1
      %s158 = scalar_select %p155, %s156, %s157
      %p161 = pneg %p155
      %p162 = scmp.eq.s32.totalorder %s20, 7
      %p163 = por %p161, %p162
      %p164 = scmp.ne.s32.totalorder %s156, %s159
      %p165 = scmp.eq.s32.totalorder %s20, 0
      %p166 = por %p164, %p165
      %p167 = scmp.ne.s32.totalorder %s156, %s159
      %p168 = scmp.eq.s32.totalorder %s25, 7
      %p169 = por %p167, %p168
      %p170 = scmp.ne.s32.totalorder %s159, %s160
      %p171 = scmp.eq.s32.totalorder %s25, 0
      %p172 = por %p170, %p171
      %p173 = scmp.ne.s32.totalorder %s159, %s160
      %p174 = scmp.eq.s32.totalorder %s26, 7
      %p175 = por %p173, %p174
      %p177 = scmp.ne.s32.totalorder %s160, %s176
      %p178 = scmp.eq.s32.totalorder %s26, 0
      %p179 = por %p177, %p178
      %s180 = ssub.s32 %s27, %s39
      %s181 = ssub.s32 %s28, %s35
      %s182 = sor.u32 %s180, %s181
      %p183 = scmp.eq.s32.totalorder %s182, 0
      %s185 = sadd.s32 %s184, 1
      %s186 = scalar_select %p183, %s184, %s185
      %p189 = pneg %p183
      %p190 = scmp.eq.s32.totalorder %s20, 7
      %p191 = por %p189, %p190
      %p192 = scmp.ne.s32.totalorder %s184, %s187
      %p193 = scmp.eq.s32.totalorder %s20, 0
      %p194 = por %p192, %p193
      %p195 = scmp.ne.s32.totalorder %s184, %s187
      %p196 = scmp.eq.s32.totalorder %s25, 7
      %p197 = por %p195, %p196
      %p198 = scmp.ne.s32.totalorder %s187, %s188
      %p199 = scmp.eq.s32.totalorder %s25, 0
      %p200 = por %p198, %p199
      %p201 = scmp.ne.s32.totalorder %s187, %s188
      %p202 = scmp.eq.s32.totalorder %s26, 7
      %p203 = por %p201, %p202
      %p205 = scmp.ne.s32.totalorder %s188, %s204
      %p206 = scmp.eq.s32.totalorder %s26, 0
      %p207 = por %p205, %p206
      %s208 = ssub.s32 %s27, %s39
      %s209 = ssub.s32 %s28, %s35
      %s210 = sor.u32 %s208, %s209
      %p211 = scmp.eq.s32.totalorder %s210, 0
      %s213 = sadd.s32 %s212, 1
      %s214 = scalar_select %p211, %s212, %s213
      %p217 = pneg %p211
      %p218 = scmp.eq.s32.totalorder %s20, 7
      %p219 = por %p217, %p218
      %p220 = scmp.ne.s32.totalorder %s212, %s215
      %p221 = scmp.eq.s32.totalorder %s20, 0
      %p222 = por %p220, %p221
      %p223 = scmp.ne.s32.totalorder %s212, %s215
      %p224 = scmp.eq.s32.totalorder %s25, 7
      %p225 = por %p223, %p224
      %p226 = scmp.ne.s32.totalorder %s215, %s216
      %p227 = scmp.eq.s32.totalorder %s25, 0
      %p228 = por %p226, %p227
      %p229 = scmp.ne.s32.totalorder %s215, %s216
      %p230 = scmp.eq.s32.totalorder %s26, 7
      %p231 = por %p229, %p230
      %p233 = scmp.ne.s32.totalorder %s216, %s232
      %p234 = scmp.eq.s32.totalorder %s26, 0
      %p235 = por %p233, %p234
      %s236 = ssub.s32 %s27, %s39
      %p237 = scmp.eq.s32.totalorder %s236, 0
      %s239 = sadd.s32 %s238, 1
      %s240 = scalar_select %p237, %s238, %s239
      %p243 = pneg %p237
      %p244 = scmp.eq.s32.totalorder %s20, 7
      %p245 = por %p243, %p244
      %p246 = scmp.ne.s32.totalorder %s238, %s241
      %p247 = scmp.eq.s32.totalorder %s20, 0
      %p248 = por %p246, %p247
      %p249 = scmp.ne.s32.totalorder %s238, %s241
      %p250 = scmp.eq.s32.totalorder %s25, 7
      %p251 = por %p249, %p250
      %p252 = scmp.ne.s32.totalorder %s241, %s242
      %p253 = scmp.eq.s32.totalorder %s25, 0
      %p254 = por %p252, %p253
      %p255 = scmp.ne.s32.totalorder %s241, %s242
      %p256 = scmp.eq.s32.totalorder %s26, 7
      %p257 = por %p255, %p256
      %p259 = scmp.ne.s32.totalorder %s242, %s258
      %p260 = scmp.eq.s32.totalorder %s26, 0
      %p261 = por %p259, %p260
      %p262 = scmp.le.s32.totalorder 1, %s20
      %p263 = scmp.lt.s32.totalorder %s20, 9
      %p264 = pnand %p262, %p263
      %p265 = pneg %p264
      // Predicated region
      $region9: #{tpu_custom_call.1} parent=5 // pred_check
        _
      $region10: #{tpu_custom_call.1} parent=5 // pred_check_branch
        %267 = sbr.rel (%p264) target = $region12
      $region11: #{tpu_custom_call.1} parent=5 // pred_region
        %s268 = ssub.s32 %s20, 1
        // Predicated region
        $region13: #{tpu_custom_call.1} parent=11 // pred_check
          %p269 = pneg %p53
        $region14: #{tpu_custom_call.1} parent=11 // pred_check_branch
          %271 = sbr.rel (%p269) target = $region16
        $region15: #{tpu_custom_call.1} parent=11 // pred_region
          %273 = vsyncadd [#allocation3], 0
          %s274 = sshll.u32 %s0, 4
          %s275 = int_to_ptr.hbm [resolvable:$true] %s274
          %s276 = sshll.u32 [#allocation2], 4
          %s277 = int_to_ptr.vmem [resolvable:$true] %s276
          %282 = dma.hbm_to_vmem [thread:$0]  %s275, 128, %s277, [#allocation3], 64, 64, 4
        $region16: #{tpu_custom_call.1} parent=11 // pred_fallthru
          _
        // Predicated region
        $region17: #{tpu_custom_call.1} parent=11 // pred_check
          %p283 = pneg %p74
        $region18: #{tpu_custom_call.1} parent=11 // pred_check_branch
          %285 = sbr.rel (%p283) target = $region20
        $region19: #{tpu_custom_call.1} parent=11 // pred_region
          %287 = vsyncadd [#allocation6], 0
          %s288 = sshll.u32 %s1, 4
          %s289 = int_to_ptr.hbm [resolvable:$true] %s288
          %s290 = sshll.u32 [#allocation5], 4
          %s291 = int_to_ptr.vmem [resolvable:$true] %s290
          %296 = dma.hbm_to_vmem [thread:$0]  %s289, 128, %s291, [#allocation6], 64, 64, 4
        $region20: #{tpu_custom_call.1} parent=11 // pred_fallthru
          _
        // Predicated region
        $region21: #{tpu_custom_call.1} parent=11 // pred_check
          %p297 = pneg %p95
        $region22: #{tpu_custom_call.1} parent=11 // pred_check_branch
          %299 = sbr.rel (%p297) target = $region24
        $region23: #{tpu_custom_call.1} parent=11 // pred_region
          %301 = vsyncadd [#allocation6], 0
          %s302 = sshll.u32 %s2, 4
          %s303 = int_to_ptr.hbm [resolvable:$true] %s302
          %s304 = sshll.u32 [#allocation7], 4
          %s305 = int_to_ptr.vmem [resolvable:$true] %s304
          %310 = dma.hbm_to_vmem [thread:$0]  %s303, 128, %s305, [#allocation6], 64, 64, 4
        $region24: #{tpu_custom_call.1} parent=11 // pred_fallthru
          _
        // Predicated region
        $region25: #{tpu_custom_call.1} parent=11 // pred_check
          %p311 = pneg %p116
        $region26: #{tpu_custom_call.1} parent=11 // pred_check_branch
          %313 = sbr.rel (%p311) target = $region28
        $region27: #{tpu_custom_call.1} parent=11 // pred_region
          %315 = vsyncadd [#allocation9], 0
          %s316 = sshll.u32 %s3, 4
          %s317 = int_to_ptr.hbm [resolvable:$true] %s316
          %s318 = sshll.u32 [#allocation8], 4
          %s319 = int_to_ptr.vmem [resolvable:$true] %s318
          %324 = dma.hbm_to_vmem [thread:$0]  %s317, 128, %s319, [#allocation9], 64, 64, 4
        $region28: #{tpu_custom_call.1} parent=11 // pred_fallthru
          _
      $region12: #{tpu_custom_call.1} parent=5 // pred_fallthru
        _
      %p325 = scmp.lt.s32.totalorder %s20, 8
      // Predicated region
      $region29: #{tpu_custom_call.1} parent=5 // pred_check
        %p326 = pneg %p325
      $region30: #{tpu_custom_call.1} parent=5 // pred_check_branch
        %328 = sbr.rel (%p326) target = $region32
      $region31: #{tpu_custom_call.1} parent=5 // pred_region
        // Predicated region
        $region33: #{tpu_custom_call.1} parent=31 // pred_check
          %p329 = pneg %p138
        $region34: #{tpu_custom_call.1} parent=31 // pred_check_branch
          %331 = sbr.rel (%p329) target = $region36
        $region35: #{tpu_custom_call.1} parent=31 // pred_region
          #allocation16 [shape = 'u32[6]{0}', space=smem, size = 0x18, scoped, tag = 'DMA stride descriptor']
          %s332 = sand.u32 %s20, 1
          %s333 = scalar_lea.sflag [#allocation3], %s332
          %s334 = sand.u32 %s128, 1
          %s335 = smul.addr %s334, 16
          %s336 = scalar_lea.vmem [#allocation10], %s335
          %338 = vsyncadd %s333, 0
          %s339 = smul.addr %s28, 2
          %s340 = smul.addr %s27, 16
          %s341 = sadd.s32 %s339, %s340
          %s342 = smul.addr %s341, 4
          %s343 = scalar_lea.hbm %s4, %s342
          %s345 = sshll.u32 1, 14
          %s346 = sxor.u32 4294967295, %s345
          %s348 = sld [smem:[#allocation0]]
          %s349 = sadd.s32 2, %s348
          %s351 = sshll.u32 7, 26
          %s352 = sxor.u32 4294967295, %s351
          %s353 = sand.u32 0, %s352
          %s354 = sshll.u32 %s349, 26
          %s355 = sor.u32 %s353, %s354
          %s356 = sshll.u32 %s343, 4
          %s357 = int_to_ptr.hbm [resolvable:$true] %s356
          %s358 = sshll.u32 %s336, 4
          %s359 = int_to_ptr.vmem [resolvable:$true] %s358
          %365 = sst [smem:[#allocation16]] 512
          %s366 = scalar_lea.smem [#allocation16], 1
          %367 = sst [smem:[%s366]] 128
          %s368 = scalar_lea.smem [#allocation16], 2
          %369 = sst [smem:[%s368]] 2
          %s370 = scalar_lea.smem [#allocation16], 3
          %371 = sst [smem:[%s370]] 64
          %s372 = scalar_lea.smem [#allocation16], 4
          %373 = sst [smem:[%s372]] 64
          %s374 = scalar_lea.smem [#allocation16], 5
          %375 = sst [smem:[%s374]] 4
          %377 = dma.general %s357, 256, %s359, %s333, [#allocation15], [#allocation16], %s355, 0
        $region36: #{tpu_custom_call.1} parent=31 // pred_fallthru
          _
        // Predicated region
        $region37: #{tpu_custom_call.1} parent=31 // pred_check
          %p378 = pneg %p166
        $region38: #{tpu_custom_call.1} parent=31 // pred_check_branch
          %380 = sbr.rel (%p378) target = $region40
        $region39: #{tpu_custom_call.1} parent=31 // pred_region
          #allocation18 [shape = 'u32[6]{0}', space=smem, size = 0x18, scoped, tag = 'DMA stride descriptor']
          %s381 = sand.u32 %s20, 1
          %s382 = scalar_lea.sflag [#allocation3], %s381
          %s383 = sand.u32 %s156, 1
          %s384 = smul.addr %s383, 16
          %s385 = scalar_lea.vmem [#allocation11], %s384
          %387 = vsyncadd %s382, 0
          %s388 = smul.addr %s28, 2
          %s389 = smul.addr %s27, 16
          %s390 = sadd.s32 %s388, %s389
          %s391 = smul.addr %s390, 4
          %s392 = scalar_lea.hbm %s5, %s391
          %s394 = sshll.u32 1, 14
          %s395 = sxor.u32 4294967295, %s394
          %s397 = sld [smem:[#allocation0]]
          %s398 = sadd.s32 2, %s397
          %s400 = sshll.u32 7, 26
          %s401 = sxor.u32 4294967295, %s400
          %s402 = sand.u32 0, %s401
          %s403 = sshll.u32 %s398, 26
          %s404 = sor.u32 %s402, %s403
          %s405 = sshll.u32 %s392, 4
          %s406 = int_to_ptr.hbm [resolvable:$true] %s405
          %s407 = sshll.u32 %s385, 4
          %s408 = int_to_ptr.vmem [resolvable:$true] %s407
          %414 = sst [smem:[#allocation18]] 512
          %s415 = scalar_lea.smem [#allocation18], 1
          %416 = sst [smem:[%s415]] 128
          %s417 = scalar_lea.smem [#allocation18], 2
          %418 = sst [smem:[%s417]] 2
          %s419 = scalar_lea.smem [#allocation18], 3
          %420 = sst [smem:[%s419]] 64
          %s421 = scalar_lea.smem [#allocation18], 4
          %422 = sst [smem:[%s421]] 64
          %s423 = scalar_lea.smem [#allocation18], 5
          %424 = sst [smem:[%s423]] 4
          %426 = dma.general %s406, 256, %s408, %s382, [#allocation17], [#allocation18], %s404, 0
        $region40: #{tpu_custom_call.1} parent=31 // pred_fallthru
          _
        // Predicated region
        $region41: #{tpu_custom_call.1} parent=31 // pred_check
          %p427 = pneg %p194
        $region42: #{tpu_custom_call.1} parent=31 // pred_check_branch
          %429 = sbr.rel (%p427) target = $region44
        $region43: #{tpu_custom_call.1} parent=31 // pred_region
          #allocation20 [shape = 'u32[6]{0}', space=smem, size = 0x18, scoped, tag = 'DMA stride descriptor']
          %s430 = sand.u32 %s20, 1
          %s431 = scalar_lea.sflag [#allocation3], %s430
          %s432 = sand.u32 %s184, 1
          %s433 = smul.addr %s432, 16
          %s434 = scalar_lea.vmem [#allocation12], %s433
          %436 = vsyncadd %s431, 0
          %s437 = smul.addr %s28, 2
          %s438 = smul.addr %s27, 16
          %s439 = sadd.s32 %s437, %s438
          %s440 = smul.addr %s439, 4
          %s441 = scalar_lea.hbm %s6, %s440
          %s443 = sshll.u32 1, 14
          %s444 = sxor.u32 4294967295, %s443
          %s446 = sld [smem:[#allocation0]]
          %s447 = sadd.s32 2, %s446
          %s449 = sshll.u32 7, 26
          %s450 = sxor.u32 4294967295, %s449
          %s451 = sand.u32 0, %s450
          %s452 = sshll.u32 %s447, 26
          %s453 = sor.u32 %s451, %s452
          %s454 = sshll.u32 %s441, 4
          %s455 = int_to_ptr.hbm [resolvable:$true] %s454
          %s456 = sshll.u32 %s434, 4
          %s457 = int_to_ptr.vmem [resolvable:$true] %s456
          %463 = sst [smem:[#allocation20]] 512
          %s464 = scalar_lea.smem [#allocation20], 1
          %465 = sst [smem:[%s464]] 128
          %s466 = scalar_lea.smem [#allocation20], 2
          %467 = sst [smem:[%s466]] 2
          %s468 = scalar_lea.smem [#allocation20], 3
          %469 = sst [smem:[%s468]] 64
          %s470 = scalar_lea.smem [#allocation20], 4
          %471 = sst [smem:[%s470]] 64
          %s472 = scalar_lea.smem [#allocation20], 5
          %473 = sst [smem:[%s472]] 4
          %475 = dma.general %s455, 256, %s457, %s431, [#allocation19], [#allocation20], %s453, 0
        $region44: #{tpu_custom_call.1} parent=31 // pred_fallthru
          _
        // Predicated region
        $region45: #{tpu_custom_call.1} parent=31 // pred_check
          %p476 = pneg %p222
        $region46: #{tpu_custom_call.1} parent=31 // pred_check_branch
          %478 = sbr.rel (%p476) target = $region48
        $region47: #{tpu_custom_call.1} parent=31 // pred_region
          #allocation22 [shape = 'u32[6]{0}', space=smem, size = 0x18, scoped, tag = 'DMA stride descriptor']
          %s479 = sand.u32 %s20, 1
          %s480 = scalar_lea.sflag [#allocation3], %s479
          %s481 = sand.u32 %s212, 1
          %s482 = smul.addr %s481, 16
          %s483 = scalar_lea.vmem [#allocation13], %s482
          %485 = vsyncadd %s480, 0
          %s486 = smul.addr %s28, 2
          %s487 = smul.addr %s27, 16
          %s488 = sadd.s32 %s486, %s487
          %s489 = smul.addr %s488, 4
          %s490 = scalar_lea.hbm %s7, %s489
          %s492 = sshll.u32 1, 14
          %s493 = sxor.u32 4294967295, %s492
          %s495 = sld [smem:[#allocation0]]
          %s496 = sadd.s32 2, %s495
          %s498 = sshll.u32 7, 26
          %s499 = sxor.u32 4294967295, %s498
          %s500 = sand.u32 0, %s499
          %s501 = sshll.u32 %s496, 26
          %s502 = sor.u32 %s500, %s501
          %s503 = sshll.u32 %s490, 4
          %s504 = int_to_ptr.hbm [resolvable:$true] %s503
          %s505 = sshll.u32 %s483, 4
          %s506 = int_to_ptr.vmem [resolvable:$true] %s505
          %512 = sst [smem:[#allocation22]] 512
          %s513 = scalar_lea.smem [#allocation22], 1
          %514 = sst [smem:[%s513]] 128
          %s515 = scalar_lea.smem [#allocation22], 2
          %516 = sst [smem:[%s515]] 2
          %s517 = scalar_lea.smem [#allocation22], 3
          %518 = sst [smem:[%s517]] 64
          %s519 = scalar_lea.smem [#allocation22], 4
          %520 = sst [smem:[%s519]] 64
          %s521 = scalar_lea.smem [#allocation22], 5
          %522 = sst [smem:[%s521]] 4
          %524 = dma.general %s504, 256, %s506, %s480, [#allocation21], [#allocation22], %s502, 0
        $region48: #{tpu_custom_call.1} parent=31 // pred_fallthru
          _
      $region32: #{tpu_custom_call.1} parent=5 // pred_fallthru
        _
      %p525 = scmp.le.s32.totalorder 1, %s20
      %p526 = scmp.lt.s32.totalorder %s20, 9
      %p527 = pnand %p525, %p526
      %p528 = pneg %p527
      // Predicated region
      $region49: #{tpu_custom_call.1} parent=5 // pred_check
        _
      $region50: #{tpu_custom_call.1} parent=5 // pred_check_branch
        %530 = sbr.rel (%p527) target = $region52
      $region51: #{tpu_custom_call.1} parent=5 // pred_region
        %s531 = ssub.s32 %s20, 1
        // Predicated region
        $region53: #{tpu_custom_call.1} parent=51 // pred_check
          %p532 = pneg %p53
        $region54: #{tpu_custom_call.1} parent=51 // pred_check_branch
          %534 = sbr.rel (%p532) target = $region56
        $region55: #{tpu_custom_call.1} parent=51 // pred_region
          %536 = dma.done [#allocation3], 128
        $region56: #{tpu_custom_call.1} parent=51 // pred_fallthru
          _
        // Predicated region
        $region57: #{tpu_custom_call.1} parent=51 // pred_check
          %p537 = pneg %p74
        $region58: #{tpu_custom_call.1} parent=51 // pred_check_branch
          %539 = sbr.rel (%p537) target = $region60
        $region59: #{tpu_custom_call.1} parent=51 // pred_region
          %541 = dma.done [#allocation6], 128
        $region60: #{tpu_custom_call.1} parent=51 // pred_fallthru
          _
        // Predicated region
        $region61: #{tpu_custom_call.1} parent=51 // pred_check
          %p542 = pneg %p95
        $region62: #{tpu_custom_call.1} parent=51 // pred_check_branch
          %544 = sbr.rel (%p542) target = $region64
        $region63: #{tpu_custom_call.1} parent=51 // pred_region
          %546 = dma.done [#allocation6], 128
        $region64: #{tpu_custom_call.1} parent=51 // pred_fallthru
          _
        // Predicated region
        $region65: #{tpu_custom_call.1} parent=51 // pred_check
          %p547 = pneg %p116
        $region66: #{tpu_custom_call.1} parent=51 // pred_check_branch
          %549 = sbr.rel (%p547) target = $region68
        $region67: #{tpu_custom_call.1} parent=51 // pred_region
          %551 = dma.done [#allocation9], 128
        $region68: #{tpu_custom_call.1} parent=51 // pred_fallthru
          _
        %s552 = sand.u32 %s25, 1
        %s553 = scalar_lea.sflag [#allocation3], %s552
        %s554 = sand.u32 %s131, 1
        %s555 = smul.addr %s554, 16
        %s556 = scalar_lea.vmem [#allocation10], %s555
        // Predicated region
        $region69: #{tpu_custom_call.1} parent=51 // pred_check
          %p557 = pneg %p144
        $region70: #{tpu_custom_call.1} parent=51 // pred_check_branch
          %559 = sbr.rel (%p557) target = $region72
        $region71: #{tpu_custom_call.1} parent=51 // pred_region
          %561 = dma.done %s553, 256
        $region72: #{tpu_custom_call.1} parent=51 // pred_fallthru
          _
        %s562 = sand.u32 %s25, 1
        %s563 = scalar_lea.sflag [#allocation3], %s562
        %s564 = sand.u32 %s159, 1
        %s565 = smul.addr %s564, 16
        %s566 = scalar_lea.vmem [#allocation11], %s565
        // Predicated region
        $region73: #{tpu_custom_call.1} parent=51 // pred_check
          %p567 = pneg %p172
        $region74: #{tpu_custom_call.1} parent=51 // pred_check_branch
          %569 = sbr.rel (%p567) target = $region76
        $region75: #{tpu_custom_call.1} parent=51 // pred_region
          %571 = dma.done %s563, 256
        $region76: #{tpu_custom_call.1} parent=51 // pred_fallthru
          _
        %s572 = sand.u32 %s25, 1
        %s573 = scalar_lea.sflag [#allocation3], %s572
        %s574 = sand.u32 %s187, 1
        %s575 = smul.addr %s574, 16
        %s576 = scalar_lea.vmem [#allocation12], %s575
        // Predicated region
        $region77: #{tpu_custom_call.1} parent=51 // pred_check
          %p577 = pneg %p200
        $region78: #{tpu_custom_call.1} parent=51 // pred_check_branch
          %579 = sbr.rel (%p577) target = $region80
        $region79: #{tpu_custom_call.1} parent=51 // pred_region
          %581 = dma.done %s573, 256
        $region80: #{tpu_custom_call.1} parent=51 // pred_fallthru
          _
        %s582 = sand.u32 %s25, 1
        %s583 = scalar_lea.sflag [#allocation3], %s582
        %s584 = sand.u32 %s215, 1
        %s585 = smul.addr %s584, 16
        %s586 = scalar_lea.vmem [#allocation13], %s585
        // Predicated region
        $region81: #{tpu_custom_call.1} parent=51 // pred_check
          %p587 = pneg %p228
        $region82: #{tpu_custom_call.1} parent=51 // pred_check_branch
          %589 = sbr.rel (%p587) target = $region84
        $region83: #{tpu_custom_call.1} parent=51 // pred_region
          %591 = dma.done %s583, 256
        $region84: #{tpu_custom_call.1} parent=51 // pred_fallthru
          _
        %p592 = pneg %p53
        %p593 = pneg %p50
        %p594 = pneg %p74
        %p595 = pneg %p71
        %p596 = pneg %p95
        %p597 = pneg %p92
        %p598 = pneg %p116
        %p599 = pneg %p113
        %s600 = sand.u32 %s25, 1
        %s601 = scalar_lea.sflag [#allocation3], %s600
        %s602 = sand.u32 %s131, 1
        %s603 = smul.addr %s602, 16
        %s604 = scalar_lea.vmem [#allocation10], %s603
        %p605 = pneg %p144
        %p606 = pneg %p141
        %s607 = sand.u32 %s25, 1
        %s608 = scalar_lea.sflag [#allocation3], %s607
        %s609 = sand.u32 %s159, 1
        %s610 = smul.addr %s609, 16
        %s611 = scalar_lea.vmem [#allocation11], %s610
        %p612 = pneg %p172
        %p613 = pneg %p169
        %s614 = sand.u32 %s25, 1
        %s615 = scalar_lea.sflag [#allocation3], %s614
        %s616 = sand.u32 %s187, 1
        %s617 = smul.addr %s616, 16
        %s618 = scalar_lea.vmem [#allocation12], %s617
        %p619 = pneg %p200
        %p620 = pneg %p197
        %s621 = sand.u32 %s25, 1
        %s622 = scalar_lea.sflag [#allocation3], %s621
        %s623 = sand.u32 %s215, 1
        %s624 = smul.addr %s623, 16
        %s625 = scalar_lea.vmem [#allocation13], %s624
        %p626 = pneg %p228
        %p627 = pneg %p225
        %p628 = pneg %p254
        %p629 = pneg %p251
        %s630 = sand.u32 %s241, 1
        %s631 = scalar_lea.sflag [#allocation4], %s630
        %s632 = sand.u32 %s241, 1
        %s633 = smul.addr %s632, 64
        %s634 = scalar_lea.vmem [#allocation14], %s633
        %v636 = vld [vmem:[%s556] sm:$0xf]
        %v637 = vld [vmem:[%s556 + $0x4] sm:$0xf]
        %v638 = vld [vmem:[%s556 + $0x8] sm:$0xf]
        %v639 = vld [vmem:[%s556 + $0xc] sm:$0xf]
        %v640 = vld [vmem:[%s566] sm:$0xf]
        %v641 = vld [vmem:[%s566 + $0x4] sm:$0xf]
        %v642 = vld [vmem:[%s566 + $0x8] sm:$0xf]
        %v643 = vld [vmem:[%s566 + $0xc] sm:$0xf]
        %v644 = vld [vmem:[#allocation2] sm:$0xf]
        %v645 = vld [vmem:[#allocation2 + $0x4] sm:$0xf]
        %v646 = vld [vmem:[#allocation5] sm:$0xf]
        %v647 = vld [vmem:[#allocation5 + $0x4] sm:$0xf]
        %v652 = vunpack.c.l.b16 %v636
        %v653 = vunpack.c.l.b16 %v637
        %v654 = vunpack.c.l.b16 %v638
        %v655 = vunpack.c.l.b16 %v639
        %v656 = vpack.c.b16 %v653, %v652
        %v657 = vpack.c.b16 %v655, %v654
        %v660 = vunpack.c.l.b16 %v644
        %v661 = vunpack.c.l.b16 %v645
        %v662 = vpack.c.b16 %v661, %v660
        %vm664 = vcmask 130048
        %v666 = vsel %vm664, %v656, 0
        %v669 = vsel %vm664, %v657, 0
        %671 = vmatpush.bf16.msra.mxu0 0
        %672 = vmatpush.bf16.msra.mxu0 0
        %673 = vmatpush.bf16.msra.mxu0 0
        %674 = vmatpush.bf16.msra.mxu0 0
        %675 = vmatpush.bf16.msra.mxu0 0
        %676 = vmatpush.bf16.msra.mxu0 0
        %677 = vmatpush.bf16.msra.mxu0 0
        %678 = vmatpush.bf16.msra.mxu0 %v662
        %679 = vmatmul.bf16.gmra.mxu0 %v666
        %v680 = vpop.f32.mrf.mxu0
        %v681 = vadd.f32 0.0, %v680
        %v682 = vpop.f32.mrf.mxu0
        %v683 = vadd.f32 0.0, %v682
        %684 = vmatmul.bf16.gmra.mxu0 %v669
        %v685 = vpop.f32.mrf.mxu0
        %v686 = vadd.f32 0.0, %v685
        %v687 = vpop.f32.mrf.mxu0
        %v688 = vadd.f32 0.0, %v687
        %689 = vdwg.mxu0
        %v694 = vunpack.c.l.b16 %v640
        %v695 = vunpack.c.l.b16 %v641
        %v696 = vunpack.c.l.b16 %v642
        %v697 = vunpack.c.l.b16 %v643
        %v698 = vpack.c.b16 %v695, %v694
        %v699 = vpack.c.b16 %v697, %v696
        %v702 = vunpack.c.l.b16 %v646
        %v703 = vunpack.c.l.b16 %v647
        %v704 = vpack.c.b16 %v703, %v702
        %v707 = vsel %vm664, %v698, 0
        %v710 = vsel %vm664, %v699, 0
        %712 = vmatpush.bf16.msra.mxu0 0
        %713 = vmatpush.bf16.msra.mxu0 0
        %714 = vmatpush.bf16.msra.mxu0 0
        %715 = vmatpush.bf16.msra.mxu0 0
        %716 = vmatpush.bf16.msra.mxu0 0
        %717 = vmatpush.bf16.msra.mxu0 0
        %718 = vmatpush.bf16.msra.mxu0 0
        %719 = vmatpush.bf16.msra.mxu0 %v704
        %720 = vmatmul.bf16.gmra.mxu0 %v707
        %v721 = vpop.f32.mrf.mxu0
        %v722 = vadd.f32 0.0, %v721
        %v723 = vpop.f32.mrf.mxu0
        %v724 = vadd.f32 0.0, %v723
        %725 = vmatmul.bf16.gmra.mxu0 %v710
        %v726 = vpop.f32.mrf.mxu0
        %v727 = vadd.f32 0.0, %v726
        %v728 = vpop.f32.mrf.mxu0
        %v729 = vadd.f32 0.0, %v728
        %730 = vdwg.mxu0
        %v731 = vsub.f32 %v681, %v722
        %v732 = vsub.f32 %v683, %v724
        %v733 = vsub.f32 %v686, %v727
        %v734 = vsub.f32 %v688, %v729
        %735 = vmatpush.bf16.msra.mxu0 0
        %736 = vmatpush.bf16.msra.mxu0 0
        %737 = vmatpush.bf16.msra.mxu0 0
        %738 = vmatpush.bf16.msra.mxu0 0
        %739 = vmatpush.bf16.msra.mxu0 0
        %740 = vmatpush.bf16.msra.mxu0 0
        %741 = vmatpush.bf16.msra.mxu0 0
        %742 = vmatpush.bf16.msra.mxu0 %v662
        %743 = vmatmul.bf16.gmra.mxu0 %v707
        %v744 = vpop.f32.mrf.mxu0
        %v745 = vadd.f32 0.0, %v744
        %v746 = vpop.f32.mrf.mxu0
        %v747 = vadd.f32 0.0, %v746
        %748 = vmatmul.bf16.gmra.mxu0 %v710
        %v749 = vpop.f32.mrf.mxu0
        %v750 = vadd.f32 0.0, %v749
        %v751 = vpop.f32.mrf.mxu0
        %v752 = vadd.f32 0.0, %v751
        %753 = vdwg.mxu0
        %754 = vmatpush.bf16.msra.mxu0 0
        %755 = vmatpush.bf16.msra.mxu0 0
        %756 = vmatpush.bf16.msra.mxu0 0
        %757 = vmatpush.bf16.msra.mxu0 0
        %758 = vmatpush.bf16.msra.mxu0 0
        %759 = vmatpush.bf16.msra.mxu0 0
        %760 = vmatpush.bf16.msra.mxu0 0
        %761 = vmatpush.bf16.msra.mxu0 %v704
        %762 = vmatmul.bf16.gmra.mxu0 %v666
        %v763 = vpop.f32.mrf.mxu0
        %v764 = vadd.f32 %v745, %v763
        %v765 = vpop.f32.mrf.mxu0
        %v766 = vadd.f32 %v747, %v765
        %767 = vmatmul.bf16.gmra.mxu0 %v669
        %v768 = vpop.f32.mrf.mxu0
        %v769 = vadd.f32 %v750, %v768
        %v770 = vpop.f32.mrf.mxu0
        %v771 = vadd.f32 %v752, %v770
        %772 = vdwg.mxu0
        %v773 = vld [vmem:[#allocation7] sm:$0xf]
        %v774 = vld [vmem:[#allocation7 + $0x4] sm:$0xf]
        %v775 = vld [vmem:[#allocation8] sm:$0xf]
        %v776 = vld [vmem:[#allocation8 + $0x4] sm:$0xf]
        %v777 = vld [vmem:[%s576] sm:$0xf]
        %v778 = vld [vmem:[%s576 + $0x4] sm:$0xf]
        %v779 = vld [vmem:[%s576 + $0x8] sm:$0xf]
        %v780 = vld [vmem:[%s576 + $0xc] sm:$0xf]
        %v781 = vld [vmem:[%s586] sm:$0xf]
        %v782 = vld [vmem:[%s586 + $0x4] sm:$0xf]
        %v783 = vld [vmem:[%s586 + $0x8] sm:$0xf]
        %v784 = vld [vmem:[%s586 + $0xc] sm:$0xf]
        %v785 = vpack.c.bf16 %v732, %v731
        %v786 = vpack.c.bf16 %v766, %v764
        %v789 = vunpack.c.l.b16 %v773
        %v790 = vunpack.c.l.b16 %v774
        %v791 = vpack.c.b16 %v790, %v789
        %v793 = vsel %vm664, %v791, 0
        %795 = vmatpush.bf16.msra.mxu0 0
        %796 = vmatpush.bf16.msra.mxu0 0
        %797 = vmatpush.bf16.msra.mxu0 0
        %798 = vmatpush.bf16.msra.mxu0 0
        %799 = vmatpush.bf16.msra.mxu0 0
        %800 = vmatpush.bf16.msra.mxu0 0
        %801 = vmatpush.bf16.msra.mxu0 0
        %802 = vmatpush.bf16.msra.mxu0 %v785
        %803 = vmatmul.bf16.gmra.mxu0 %v793
        %v804 = vpop.f32.mrf.mxu0
        %v805 = vadd.f32 0.0, %v804
        %v806 = vpop.f32.mrf.mxu0
        %v807 = vadd.f32 0.0, %v806
        %808 = vdwg.mxu0
        %v811 = vunpack.c.l.b16 %v775
        %v812 = vunpack.c.l.b16 %v776
        %v813 = vpack.c.b16 %v812, %v811
        %v815 = vsel %vm664, %v813, 0
        %817 = vmatpush.bf16.msra.mxu0 0
        %818 = vmatpush.bf16.msra.mxu0 0
        %819 = vmatpush.bf16.msra.mxu0 0
        %820 = vmatpush.bf16.msra.mxu0 0
        %821 = vmatpush.bf16.msra.mxu0 0
        %822 = vmatpush.bf16.msra.mxu0 0
        %823 = vmatpush.bf16.msra.mxu0 0
        %824 = vmatpush.bf16.msra.mxu0 %v786
        %825 = vmatmul.bf16.gmra.mxu0 %v815
        %v826 = vpop.f32.mrf.mxu0
        %v827 = vadd.f32 0.0, %v826
        %v828 = vpop.f32.mrf.mxu0
        %v829 = vadd.f32 0.0, %v828
        %830 = vdwg.mxu0
        %v831 = vsub.f32 %v805, %v827
        %v832 = vsub.f32 %v807, %v829
        %833 = vmatpush.bf16.msra.mxu0 0
        %834 = vmatpush.bf16.msra.mxu0 0
        %835 = vmatpush.bf16.msra.mxu0 0
        %836 = vmatpush.bf16.msra.mxu0 0
        %837 = vmatpush.bf16.msra.mxu0 0
        %838 = vmatpush.bf16.msra.mxu0 0
        %839 = vmatpush.bf16.msra.mxu0 0
        %840 = vmatpush.bf16.msra.mxu0 %v785
        %841 = vmatmul.bf16.gmra.mxu0 %v815
        %v842 = vpop.f32.mrf.mxu0
        %v843 = vadd.f32 0.0, %v842
        %v844 = vpop.f32.mrf.mxu0
        %v845 = vadd.f32 0.0, %v844
        %846 = vdwg.mxu0
        %847 = vmatpush.bf16.msra.mxu0 0
        %848 = vmatpush.bf16.msra.mxu0 0
        %849 = vmatpush.bf16.msra.mxu0 0
        %850 = vmatpush.bf16.msra.mxu0 0
        %851 = vmatpush.bf16.msra.mxu0 0
        %852 = vmatpush.bf16.msra.mxu0 0
        %853 = vmatpush.bf16.msra.mxu0 0
        %854 = vmatpush.bf16.msra.mxu0 %v786
        %855 = vmatmul.bf16.gmra.mxu0 %v793
        %v856 = vpop.f32.mrf.mxu0
        %v857 = vadd.f32 %v843, %v856
        %v858 = vpop.f32.mrf.mxu0
        %v859 = vadd.f32 %v845, %v858
        %860 = vdwg.mxu0
        %v861 = vunpack.c.l.bf16 %v777
        %v862 = vunpack.c.l.bf16 %v778
        %v863 = vunpack.c.l.bf16 %v781
        %v864 = vunpack.c.l.bf16 %v782
        %v865 = vmul.f32 %v831, %v861
        %v866 = vmul.f32 %v832, %v862
        %v867 = vmul.f32 %v857, %v863
        %v868 = vmul.f32 %v859, %v864
        %v869 = vadd.f32 %v865, %v867
        %v870 = vadd.f32 %v866, %v868
        %v871 = vmul.f32 %v857, %v861
        %v872 = vmul.f32 %v859, %v862
        %v873 = vmul.f32 %v831, %v863
        %v874 = vmul.f32 %v832, %v864
        %v875 = vsub.f32 %v871, %v873
        %v876 = vsub.f32 %v872, %v874
        %v877 = vpack.c.bf16 %v734, %v733
        %v878 = vpack.c.bf16 %v771, %v769
        %879 = vmatpush.bf16.msra.mxu0 0
        %880 = vmatpush.bf16.msra.mxu0 0
        %881 = vmatpush.bf16.msra.mxu0 0
        %882 = vmatpush.bf16.msra.mxu0 0
        %883 = vmatpush.bf16.msra.mxu0 0
        %884 = vmatpush.bf16.msra.mxu0 0
        %885 = vmatpush.bf16.msra.mxu0 0
        %886 = vmatpush.bf16.msra.mxu0 %v877
        %887 = vmatmul.bf16.gmra.mxu0 %v793
        %v888 = vpop.f32.mrf.mxu0
        %v889 = vadd.f32 0.0, %v888
        %v890 = vpop.f32.mrf.mxu0
        %v891 = vadd.f32 0.0, %v890
        %892 = vdwg.mxu0
        %893 = vmatpush.bf16.msra.mxu0 0
        %894 = vmatpush.bf16.msra.mxu0 0
        %895 = vmatpush.bf16.msra.mxu0 0
        %896 = vmatpush.bf16.msra.mxu0 0
        %897 = vmatpush.bf16.msra.mxu0 0
        %898 = vmatpush.bf16.msra.mxu0 0
        %899 = vmatpush.bf16.msra.mxu0 0
        %900 = vmatpush.bf16.msra.mxu0 %v878
        %901 = vmatmul.bf16.gmra.mxu0 %v815
        %v902 = vpop.f32.mrf.mxu0
        %v903 = vadd.f32 0.0, %v902
        %v904 = vpop.f32.mrf.mxu0
        %v905 = vadd.f32 0.0, %v904
        %906 = vdwg.mxu0
        %v907 = vsub.f32 %v889, %v903
        %v908 = vsub.f32 %v891, %v905
        %909 = vmatpush.bf16.msra.mxu0 0
        %910 = vmatpush.bf16.msra.mxu0 0
        %911 = vmatpush.bf16.msra.mxu0 0
        %912 = vmatpush.bf16.msra.mxu0 0
        %913 = vmatpush.bf16.msra.mxu0 0
        %914 = vmatpush.bf16.msra.mxu0 0
        %915 = vmatpush.bf16.msra.mxu0 0
        %916 = vmatpush.bf16.msra.mxu0 %v877
        %917 = vmatmul.bf16.gmra.mxu0 %v815
        %v918 = vpop.f32.mrf.mxu0
        %v919 = vadd.f32 0.0, %v918
        %v920 = vpop.f32.mrf.mxu0
        %v921 = vadd.f32 0.0, %v920
        %922 = vdwg.mxu0
        %923 = vmatpush.bf16.msra.mxu0 0
        %924 = vmatpush.bf16.msra.mxu0 0
        %925 = vmatpush.bf16.msra.mxu0 0
        %926 = vmatpush.bf16.msra.mxu0 0
        %927 = vmatpush.bf16.msra.mxu0 0
        %928 = vmatpush.bf16.msra.mxu0 0
        %929 = vmatpush.bf16.msra.mxu0 0
        %930 = vmatpush.bf16.msra.mxu0 %v878
        %931 = vmatmul.bf16.gmra.mxu0 %v793
        %v932 = vpop.f32.mrf.mxu0
        %v933 = vadd.f32 %v919, %v932
        %v934 = vpop.f32.mrf.mxu0
        %v935 = vadd.f32 %v921, %v934
        %936 = vdwg.mxu0
        %v937 = vunpack.c.l.bf16 %v779
        %v938 = vunpack.c.l.bf16 %v780
        %v939 = vunpack.c.l.bf16 %v783
        %v940 = vunpack.c.l.bf16 %v784
        %v941 = vmul.f32 %v907, %v937
        %v942 = vmul.f32 %v908, %v938
        %v943 = vmul.f32 %v933, %v939
        %v944 = vmul.f32 %v935, %v940
        %v945 = vadd.f32 %v941, %v943
        %v946 = vadd.f32 %v942, %v944
        %v947 = vmul.f32 %v933, %v937
        %v948 = vmul.f32 %v935, %v938
        %v949 = vmul.f32 %v907, %v939
        %v950 = vmul.f32 %v908, %v940
        %v951 = vsub.f32 %v947, %v949
        %v952 = vsub.f32 %v948, %v950
        %p953 = scmp.eq.s32.totalorder %s30, 0
        // Predicated region
        $region85: #{tpu_custom_call.1} parent=51 // pred_check
          %p954 = pneg %p953
        $region86: #{tpu_custom_call.1} parent=51 // pred_check_branch
          %956 = sbr.rel (%p954) target = $region88
        $region87: #{tpu_custom_call.1} parent=51 // pred_region
          %957 = vst.msk [vmem:[%s634] sm:$0xff] %vm664, %v869
          %958 = vst.msk [vmem:[%s634 + $0x8] sm:$0xff] %vm664, %v870
          %s959 = scalar_lea.vmem %s634, 32 [#allocation14]
          %960 = vst.msk [vmem:[%s959] sm:$0xff] %vm664, %v875
          %961 = vst.msk [vmem:[%s959 + $0x8] sm:$0xff] %vm664, %v876
          %s962 = scalar_lea.vmem %s634, 16 [#allocation14]
          %963 = vst.msk [vmem:[%s962] sm:$0xff] %vm664, %v945
          %964 = vst.msk [vmem:[%s962 + $0x8] sm:$0xff] %vm664, %v946
          %s965 = scalar_lea.vmem %s634, 48 [#allocation14]
          %966 = vst.msk [vmem:[%s965] sm:$0xff] %vm664, %v951
          %967 = vst.msk [vmem:[%s965 + $0x8] sm:$0xff] %vm664, %v952
        $region88: #{tpu_custom_call.1} parent=51 // pred_fallthru
          _
        %p968 = scmp.ne.s32.totalorder %s30, 0
        // Predicated region
        $region89: #{tpu_custom_call.1} parent=51 // pred_check
          %p969 = pneg %p968
        $region90: #{tpu_custom_call.1} parent=51 // pred_check_branch
          %971 = sbr.rel (%p969) target = $region92
        $region91: #{tpu_custom_call.1} parent=51 // pred_region
          %v972 = vld [vmem:[%s634] sm:$0xff]
          %v973 = vld [vmem:[%s634 + $0x8] sm:$0xff]
          %v974 = vadd.f32 %v972, %v869
          %v975 = vadd.f32 %v973, %v870
          %976 = vst.msk [vmem:[%s634] sm:$0xff] %vm664, %v974
          %977 = vst.msk [vmem:[%s634 + $0x8] sm:$0xff] %vm664, %v975
          %s978 = scalar_lea.vmem %s634, 32 [#allocation14]
          %v979 = vld [vmem:[%s978] sm:$0xff]
          %v980 = vld [vmem:[%s978 + $0x8] sm:$0xff]
          %v981 = vadd.f32 %v979, %v875
          %v982 = vadd.f32 %v980, %v876
          %983 = vst.msk [vmem:[%s978] sm:$0xff] %vm664, %v981
          %984 = vst.msk [vmem:[%s978 + $0x8] sm:$0xff] %vm664, %v982
          %s985 = scalar_lea.vmem %s634, 16 [#allocation14]
          %v986 = vld [vmem:[%s985] sm:$0xff]
          %v987 = vld [vmem:[%s985 + $0x8] sm:$0xff]
          %v988 = vadd.f32 %v986, %v945
          %v989 = vadd.f32 %v987, %v946
          %990 = vst.msk [vmem:[%s985] sm:$0xff] %vm664, %v988
          %991 = vst.msk [vmem:[%s985 + $0x8] sm:$0xff] %vm664, %v989
          %s992 = scalar_lea.vmem %s634, 48 [#allocation14]
          %v993 = vld [vmem:[%s992] sm:$0xff]
          %v994 = vld [vmem:[%s992 + $0x8] sm:$0xff]
          %v995 = vadd.f32 %v993, %v951
          %v996 = vadd.f32 %v994, %v952
          %997 = vst.msk [vmem:[%s992] sm:$0xff] %vm664, %v995
          %998 = vst.msk [vmem:[%s992 + $0x8] sm:$0xff] %vm664, %v996
        $region92: #{tpu_custom_call.1} parent=51 // pred_fallthru
          _
        %s999 = sand.u32 %s241, 1
        %s1000 = scalar_lea.sflag [#allocation4], %s999
        %s1001 = sand.u32 %s241, 1
        %s1002 = smul.addr %s1001, 64
        %s1003 = scalar_lea.vmem [#allocation14], %s1002
        // Predicated region
        $region93: #{tpu_custom_call.1} parent=51 // pred_check
          %p1004 = pneg %p251
        $region94: #{tpu_custom_call.1} parent=51 // pred_check_branch
          %1006 = sbr.rel (%p1004) target = $region96
        $region95: #{tpu_custom_call.1} parent=51 // pred_region
          %1008 = vsyncadd %s1000, 0
          %s1009 = smul.addr %s29, 8
          %s1010 = smul.addr %s1009, 8
          %s1011 = scalar_lea.hbm %s8, %s1010
          %s1012 = sshll.u32 %s1003, 4
          %s1013 = int_to_ptr.vmem [resolvable:$true] %s1012
          %s1014 = sshll.u32 %s1011, 4
          %s1015 = int_to_ptr.hbm [resolvable:$true] %s1014
          %1020 = dma.vmem_to_hbm [thread:$0]  %s1013, 1024, %s1015, %s1000, 128, 128, 8
        $region96: #{tpu_custom_call.1} parent=51 // pred_fallthru
          _
      $region52: #{tpu_custom_call.1} parent=5 // pred_fallthru
        _
      %p1021 = scmp.le.s32.totalorder 2, %s20
      // Predicated region
      $region97: #{tpu_custom_call.1} parent=5 // pred_check
        %p1022 = pneg %p1021
      $region98: #{tpu_custom_call.1} parent=5 // pred_check_branch
        %1024 = sbr.rel (%p1022) target = $region100
      $region99: #{tpu_custom_call.1} parent=5 // pred_region
        %s1025 = ssub.s32 %s20, 2
        // Predicated region
        $region101: #{tpu_custom_call.1} parent=99 // pred_check
          %p1026 = pneg %p257
        $region102: #{tpu_custom_call.1} parent=99 // pred_check_branch
          %1028 = sbr.rel (%p1026) target = $region104
        $region103: #{tpu_custom_call.1} parent=99 // pred_region
          %s1029 = sand.u32 %s242, 1
          %s1030 = scalar_lea.sflag [#allocation4], %s1029
          %s1031 = sand.u32 %s242, 1
          %s1032 = smul.addr %s1031, 64
          %s1033 = scalar_lea.vmem [#allocation14], %s1032
          %1035 = dma.done %s1030, 1024
        $region104: #{tpu_custom_call.1} parent=99 // pred_fallthru
          _
      $region100: #{tpu_custom_call.1} parent=5 // pred_fallthru
        _
    $region6: #{tpu_custom_call.1} parent=1 // loop_footer
      %s24 = sadd.s32 1, %s20
    $region7: #{tpu_custom_call.1} parent=1 // loop_footer_branch
      %19 = sbr.rel target = $region3
    $region8: #{tpu_custom_call.1} parent=1 // loop_exit
      _
    %1036 = vsyncpa [#allocation3], 1
    %s1037 = scalar_lea.sflag [#allocation3], 1
    %1038 = vsyncpa %s1037, 1
    %1039 = vsyncpa [#allocation6], 1
    %1040 = vsyncpa [#allocation9], 1
    %1041 = vsyncpa [#allocation4], 1
    %s1042 = scalar_lea.sflag [#allocation4], 1
    %1043 = vsyncpa %s1042, 1

</llo_original>
